<compile_context>
chip_gen: v7x
topology: tpu7x:2x2x1
jax: 0.10.0
libtpu: 0.0.40
codegen_flags: <defaults>
</compile_context>

<pallas_src>
import functools

import jax
import jax.numpy as jnp
from jax import lax
from jax.experimental import pallas as pl
from jax.experimental.pallas import tpu as pltpu


def _round_up(n, m):
    return ((n + m - 1) // m) * m


def _mha_kernel(x_ref, w_ref, b_ref, o_ref, *, H, C, C8p):
    # x_ref: (1, C, W)           raw input block for one batch element
    # w_ref: (R, C)              packed rows: [Q heads (H*C8p) ; K heads (H*C8p) ; V heads (H*C)]
    # b_ref: (R, 1)              matching packed biases (zero for Q/K pad rows)
    # o_ref: (1, H*C, W)
    x = x_ref[0]                                                          # (C, W)

    # One fused projection matmul for all heads' Q, K and V; bias via lane-broadcast add.
    proj = jnp.dot(w_ref[...], x, preferred_element_type=jnp.float32) + b_ref[...]   # (R, W)

    nqk = H * C8p
    outs = []
    for h in range(H):  # H=4, unrolled at trace time; all slices are sublane-aligned
        q_h = proj[h * C8p:(h + 1) * C8p, :]                              # (C8p, W)
        k_h = proj[nqk + h * C8p:nqk + (h + 1) * C8p, :]                  # (C8p, W)
        v_h = proj[2 * nqk + h * C:2 * nqk + (h + 1) * C, :]              # (C,   W)

        # energy_t[j, i] = sum_c k[c, j] * q[c, i]  ( == energy[i, j] of the reference )
        energy_t = lax.dot_general(
            k_h, q_h, dimension_numbers=(((0,), (0,)), ((), ())),
            preferred_element_type=jnp.float32)                           # (W, W)

        # softmax over j (axis 0 of energy_t): sublane-axis reductions, no 128x128 transpose.
        m = jnp.max(energy_t, axis=0, keepdims=True)                      # (1, W)
        e = jnp.exp(energy_t - m)                                         # (W, W) f32
        denom_inv = pl.reciprocal(jnp.sum(e, axis=0, keepdims=True), approx=True)   # (1, W)

        # attn_t never materialized: out[c, i] = sum_j v[c, j]*attn[i, j]
        #                                      = (v @ e)[c, i] * denom_inv[i]
        out_h = jnp.dot(v_h.astype(jnp.bfloat16), e.astype(jnp.bfloat16),
                        preferred_element_type=jnp.float32) * denom_inv   # (C, W)
        outs.append(out_h)

    # Single contiguous, lane-dense store of all heads' outputs.
    o_ref[0] = jnp.concatenate(outs, axis=0).astype(o_ref.dtype)


def pack_params(wq, bq, wk, bk, wv, bv):
    """Pack per-head Conv1d(k=1) weights once, at parameter-load time (NOT per forward call).
       wq/wk: (H, C//8, C), bq/bk: (H, C//8, 1), wv: (H, C, C), bv: (H, C, 1).
       Returns w_packed (2*H*C8p + H*C, C) and b_packed (..., 1); Q/K rows zero-padded to a
       sublane multiple (zero weight + zero bias rows contribute exactly 0 to the Q.K energy)."""
    H, C8, C = wq.shape
    C8p = _round_up(C8, 8)

    def _pad_rows(w, b):
        pad = C8p - C8
        wz = jnp.concatenate([w, jnp.zeros((H, pad, C), w.dtype)], axis=1)
        bz = jnp.concatenate([b, jnp.zeros((H, pad, 1), b.dtype)], axis=1)
        return wz.reshape(H * C8p, C), bz.reshape(H * C8p, 1)

    wq_s, bq_s = _pad_rows(wq, bq)
    wk_s, bk_s = _pad_rows(wk, bk)
    wv_s = wv.reshape(H * C, C)
    bv_s = bv.reshape(H * C, 1)

    w_packed = jnp.concatenate([wq_s, wk_s, wv_s], axis=0)   # (2*H*C8p + H*C, C)
    b_packed = jnp.concatenate([bq_s, bk_s, bv_s], axis=0)   # (2*H*C8p + H*C, 1)
    return w_packed, b_packed


def multihead_attn(x, w_packed, b_packed, *, num_heads=4):
    """x: (B, C, W); w_packed/b_packed from pack_params.
       Returns (B, num_heads*C, W) = concat of per-head `out` along the channel dim."""
    B, C, W = x.shape
    R = w_packed.shape[0]
    C8p = (R - num_heads * C) // (2 * num_heads)

    kernel = functools.partial(_mha_kernel, H=num_heads, C=C, C8p=C8p)

    return pl.pallas_call(
        kernel,
        out_shape=jax.ShapeDtypeStruct((B, num_heads * C, W), x.dtype),
        grid_spec=pltpu.PrefetchScalarGridSpec(
            num_scalar_prefetch=0,
            grid=(B,),                                        # one program per batch element
            in_specs=[
                pl.BlockSpec((1, C, W), lambda b: (b, 0, 0)),     # raw x (no augmentation)
                pl.BlockSpec((R, C), lambda b: (0, 0)),           # fused packed weights
                pl.BlockSpec((R, 1), lambda b: (0, 0)),           # packed biases
            ],
            out_specs=pl.BlockSpec((1, num_heads * C, W), lambda b: (b, 0, 0)),
        ),
        compiler_params=pltpu.CompilerParams(
            dimension_semantics=("parallel",)),               # batch axis shards over v7x's 2 TCs
    )(x, w_packed, b_packed)


def _reference(x, wq, bq, wk, bk, wv, bv):
    """Pure-JAX f32 reference of the same computation (for verification)."""
    outs = []
    for h in range(wq.shape[0]):
        q = jnp.einsum('oc,bcw->bow', wq[h], x) + bq[h][None, :, :]    # (B, C8, W)
        k = jnp.einsum('oc,bcw->bow', wk[h], x) + bk[h][None, :, :]    # (B, C8, W)
        v = jnp.einsum('oc,bcw->bow', wv[h], x) + bv[h][None, :, :]    # (B, C,  W)
        energy = jnp.einsum('bci,bcj->bij', q, k)                      # (B, W, W)
        attn = jax.nn.softmax(energy, axis=-1)
        out = jnp.einsum('bcj,bij->bci', v, attn)                      # (B, C, W)
        outs.append(out)
    return jnp.concatenate(outs, axis=1)


if __name__ == "__main__":
    B, C, W = 2, 16, 128        # in_ch=16 so in_ch//8 = 2
    H = 4
    C8 = C // 8

    key = jax.random.PRNGKey(0)
    kx, kwq, kbq, kwk, kbk, kwv, kbv = jax.random.split(key, 7)

    x = jax.random.normal(kx, (B, C, W), dtype=jnp.float32)

    # Conv1d(kernel_size=1) weights == plain (out_ch, in_ch) matrices + bias.
    scale = 1.0 / jnp.sqrt(C)
    wq = jax.random.normal(kwq, (H, C8, C), dtype=jnp.float32) * scale
    bq = jax.random.normal(kbq, (H, C8, 1), dtype=jnp.float32) * scale
    wk = jax.random.normal(kwk, (H, C8, C), dtype=jnp.float32) * scale
    bk = jax.random.normal(kbk, (H, C8, 1), dtype=jnp.float32) * scale
    wv = jax.random.normal(kwv, (H, C, C), dtype=jnp.float32) * scale
    bv = jax.random.normal(kbv, (H, C, 1), dtype=jnp.float32) * scale

    # Weight packing happens once, outside the forward hot path.
    w_packed, b_packed = pack_params(wq, bq, wk, bk, wv, bv)
    w_packed, b_packed = jax.block_until_ready((w_packed, b_packed))

    forward = jax.jit(functools.partial(multihead_attn, num_heads=H))

    out = forward(x, w_packed, b_packed)
    out = jax.block_until_ready(out)

    ref = _reference(x, wq, bq, wk, bk, wv, bv)
    assert out.shape == (B, H * C, W), out.shape
    # tolerance covers bf16 P.V matmul (f32 accumulation) + approx EUP reciprocal in the softmax
    assert jnp.allclose(out, ref, atol=5e-3, rtol=5e-3), "mismatch vs reference"

    print("KERNEL_OK")
</pallas_src>

<mosaic_0001>
module attributes {stable_mosaic.version = 11 : i64} {
  func.func @_mha_kernel(%arg0: i32, %arg1: memref<1x16x128xf32, #tpu.memory_space<vmem>>, %arg2: memref<128x16xf32, #tpu.memory_space<vmem>>, %arg3: memref<128x1xf32, #tpu.memory_space<vmem>>, %arg4: memref<1x64x128xf32, #tpu.memory_space<vmem>>) attributes {dimension_semantics = [#tpu.dimension_semantics<parallel>], iteration_bounds = array<i64: 2>, scalar_prefetch = 0 : i64, scratch_operands = 0 : i64, tpu.core_type = #tpu.core_type<tc>, window_params = [{transform_indices = @transform_0, window_bounds = array<i64: 1, 16, 128>}, {pipeline_mode = #tpu.pipeline_mode<synchronous>, transform_indices = @transform_1, window_bounds = array<i64: 128, 16>}, {pipeline_mode = #tpu.pipeline_mode<synchronous>, transform_indices = @transform_2, window_bounds = array<i64: 128, 1>}, {transform_indices = @transform_3, window_bounds = array<i64: 1, 64, 128>}]} {
    %c0 = arith.constant 0 : index
    %c0_0 = arith.constant 0 : index
    %c0_1 = arith.constant 0 : index
    %0 = vector.load %arg1[%c0, %c0_0, %c0_1] : memref<1x16x128xf32, #tpu.memory_space<vmem>>, vector<1x16x128xf32>
    %1 = vector.shape_cast %0 : vector<1x16x128xf32> to vector<16x128xf32>
    %c0_2 = arith.constant 0 : index
    %c0_3 = arith.constant 0 : index
    %2 = vector.load %arg2[%c0_2, %c0_3] : memref<128x16xf32, #tpu.memory_space<vmem>>, vector<128x16xf32>
    %cst = arith.constant dense<0.000000e+00> : vector<128x128xf32>
    %3 = tpu.matmul %2, %1, %cst {dimension_numbers = #tpu.dot_dimension_numbers<[1], [0], [0], [1], [0, 0, 1, 1], [], []>} : vector<128x16xf32>, vector<16x128xf32>, vector<128x128xf32> -> vector<128x128xf32>
    %c0_4 = arith.constant 0 : index
    %c0_5 = arith.constant 0 : index
    %4 = vector.load %arg3[%c0_4, %c0_5] : memref<128x1xf32, #tpu.memory_space<vmem>>, vector<128x1xf32>
    %5 = vector.broadcast %4 : vector<128x1xf32> to vector<128x128xf32>
    %6 = arith.addf %3, %5 : vector<128x128xf32>
    %7 = vector.extract_strided_slice %6 {offsets = [0, 0], sizes = [8, 128], strides = [1, 1]} : vector<128x128xf32> to vector<8x128xf32>
    %8 = vector.extract_strided_slice %6 {offsets = [32, 0], sizes = [8, 128], strides = [1, 1]} : vector<128x128xf32> to vector<8x128xf32>
    %9 = vector.extract_strided_slice %6 {offsets = [64, 0], sizes = [16, 128], strides = [1, 1]} : vector<128x128xf32> to vector<16x128xf32>
    %cst_6 = arith.constant dense<0.000000e+00> : vector<128x128xf32>
    %10 = tpu.matmul %8, %7, %cst_6 {dimension_numbers = #tpu.dot_dimension_numbers<[0], [0], [1], [1], [0, 1, 1, 1], [], []>} : vector<8x128xf32>, vector<8x128xf32>, vector<128x128xf32> -> vector<128x128xf32>
    %cst_7 = arith.constant dense<0xFF800000> : vector<128xf32>
    %11 = vector.multi_reduction <maximumf>, %10, %cst_7 [0] : vector<128x128xf32> to vector<128xf32>
    %12 = vector.shape_cast %11 : vector<128xf32> to vector<1x128xf32>
    %13 = vector.broadcast %12 : vector<1x128xf32> to vector<128x128xf32>
    %14 = arith.subf %10, %13 : vector<128x128xf32>
    %15 = math.exp %14 : vector<128x128xf32>
    %cst_8 = arith.constant dense<0.000000e+00> : vector<128xf32>
    %16 = vector.multi_reduction <add>, %15, %cst_8 [0] : vector<128x128xf32> to vector<128xf32>
    %17 = vector.shape_cast %16 : vector<128xf32> to vector<1x128xf32>
    %18 = tpu.reciprocal %17 {approx = true} : vector<1x128xf32> -> vector<1x128xf32>
    %19 = arith.truncf %9 : vector<16x128xf32> to vector<16x128xbf16>
    %20 = arith.truncf %15 : vector<128x128xf32> to vector<128x128xbf16>
    %cst_9 = arith.constant dense<0.000000e+00> : vector<16x128xf32>
    %21 = tpu.matmul %19, %20, %cst_9 {dimension_numbers = #tpu.dot_dimension_numbers<[1], [0], [0], [1], [0, 0, 1, 1], [], []>} : vector<16x128xbf16>, vector<128x128xbf16>, vector<16x128xf32> -> vector<16x128xf32>
    %22 = vector.broadcast %18 : vector<1x128xf32> to vector<16x128xf32>
    %23 = arith.mulf %21, %22 : vector<16x128xf32>
    %24 = vector.extract_strided_slice %6 {offsets = [8, 0], sizes = [8, 128], strides = [1, 1]} : vector<128x128xf32> to vector<8x128xf32>
    %25 = vector.extract_strided_slice %6 {offsets = [40, 0], sizes = [8, 128], strides = [1, 1]} : vector<128x128xf32> to vector<8x128xf32>
    %26 = vector.extract_strided_slice %6 {offsets = [80, 0], sizes = [16, 128], strides = [1, 1]} : vector<128x128xf32> to vector<16x128xf32>
    %cst_10 = arith.constant dense<0.000000e+00> : vector<128x128xf32>
    %27 = tpu.matmul %25, %24, %cst_10 {dimension_numbers = #tpu.dot_dimension_numbers<[0], [0], [1], [1], [0, 1, 1, 1], [], []>} : vector<8x128xf32>, vector<8x128xf32>, vector<128x128xf32> -> vector<128x128xf32>
    %cst_11 = arith.constant dense<0xFF800000> : vector<128xf32>
    %28 = vector.multi_reduction <maximumf>, %27, %cst_11 [0] : vector<128x128xf32> to vector<128xf32>
    %29 = vector.shape_cast %28 : vector<128xf32> to vector<1x128xf32>
    %30 = vector.broadcast %29 : vector<1x128xf32> to vector<128x128xf32>
    %31 = arith.subf %27, %30 : vector<128x128xf32>
    %32 = math.exp %31 : vector<128x128xf32>
    %cst_12 = arith.constant dense<0.000000e+00> : vector<128xf32>
    %33 = vector.multi_reduction <add>, %32, %cst_12 [0] : vector<128x128xf32> to vector<128xf32>
    %34 = vector.shape_cast %33 : vector<128xf32> to vector<1x128xf32>
    %35 = tpu.reciprocal %34 {approx = true} : vector<1x128xf32> -> vector<1x128xf32>
    %36 = arith.truncf %26 : vector<16x128xf32> to vector<16x128xbf16>
    %37 = arith.truncf %32 : vector<128x128xf32> to vector<128x128xbf16>
    %cst_13 = arith.constant dense<0.000000e+00> : vector<16x128xf32>
    %38 = tpu.matmul %36, %37, %cst_13 {dimension_numbers = #tpu.dot_dimension_numbers<[1], [0], [0], [1], [0, 0, 1, 1], [], []>} : vector<16x128xbf16>, vector<128x128xbf16>, vector<16x128xf32> -> vector<16x128xf32>
    %39 = vector.broadcast %35 : vector<1x128xf32> to vector<16x128xf32>
    %40 = arith.mulf %38, %39 : vector<16x128xf32>
    %41 = vector.extract_strided_slice %6 {offsets = [16, 0], sizes = [8, 128], strides = [1, 1]} : vector<128x128xf32> to vector<8x128xf32>
    %42 = vector.extract_strided_slice %6 {offsets = [48, 0], sizes = [8, 128], strides = [1, 1]} : vector<128x128xf32> to vector<8x128xf32>
    %43 = vector.extract_strided_slice %6 {offsets = [96, 0], sizes = [16, 128], strides = [1, 1]} : vector<128x128xf32> to vector<16x128xf32>
    %cst_14 = arith.constant dense<0.000000e+00> : vector<128x128xf32>
    %44 = tpu.matmul %42, %41, %cst_14 {dimension_numbers = #tpu.dot_dimension_numbers<[0], [0], [1], [1], [0, 1, 1, 1], [], []>} : vector<8x128xf32>, vector<8x128xf32>, vector<128x128xf32> -> vector<128x128xf32>
    %cst_15 = arith.constant dense<0xFF800000> : vector<128xf32>
    %45 = vector.multi_reduction <maximumf>, %44, %cst_15 [0] : vector<128x128xf32> to vector<128xf32>
    %46 = vector.shape_cast %45 : vector<128xf32> to vector<1x128xf32>
    %47 = vector.broadcast %46 : vector<1x128xf32> to vector<128x128xf32>
    %48 = arith.subf %44, %47 : vector<128x128xf32>
    %49 = math.exp %48 : vector<128x128xf32>
    %cst_16 = arith.constant dense<0.000000e+00> : vector<128xf32>
    %50 = vector.multi_reduction <add>, %49, %cst_16 [0] : vector<128x128xf32> to vector<128xf32>
    %51 = vector.shape_cast %50 : vector<128xf32> to vector<1x128xf32>
    %52 = tpu.reciprocal %51 {approx = true} : vector<1x128xf32> -> vector<1x128xf32>
    %53 = arith.truncf %43 : vector<16x128xf32> to vector<16x128xbf16>
    %54 = arith.truncf %49 : vector<128x128xf32> to vector<128x128xbf16>
    %cst_17 = arith.constant dense<0.000000e+00> : vector<16x128xf32>
    %55 = tpu.matmul %53, %54, %cst_17 {dimension_numbers = #tpu.dot_dimension_numbers<[1], [0], [0], [1], [0, 0, 1, 1], [], []>} : vector<16x128xbf16>, vector<128x128xbf16>, vector<16x128xf32> -> vector<16x128xf32>
    %56 = vector.broadcast %52 : vector<1x128xf32> to vector<16x128xf32>
    %57 = arith.mulf %55, %56 : vector<16x128xf32>
    %58 = vector.extract_strided_slice %6 {offsets = [24, 0], sizes = [8, 128], strides = [1, 1]} : vector<128x128xf32> to vector<8x128xf32>
    %59 = vector.extract_strided_slice %6 {offsets = [56, 0], sizes = [8, 128], strides = [1, 1]} : vector<128x128xf32> to vector<8x128xf32>
    %60 = vector.extract_strided_slice %6 {offsets = [112, 0], sizes = [16, 128], strides = [1, 1]} : vector<128x128xf32> to vector<16x128xf32>
    %cst_18 = arith.constant dense<0.000000e+00> : vector<128x128xf32>
    %61 = tpu.matmul %59, %58, %cst_18 {dimension_numbers = #tpu.dot_dimension_numbers<[0], [0], [1], [1], [0, 1, 1, 1], [], []>} : vector<8x128xf32>, vector<8x128xf32>, vector<128x128xf32> -> vector<128x128xf32>
    %cst_19 = arith.constant dense<0xFF800000> : vector<128xf32>
    %62 = vector.multi_reduction <maximumf>, %61, %cst_19 [0] : vector<128x128xf32> to vector<128xf32>
    %63 = vector.shape_cast %62 : vector<128xf32> to vector<1x128xf32>
    %64 = vector.broadcast %63 : vector<1x128xf32> to vector<128x128xf32>
    %65 = arith.subf %61, %64 : vector<128x128xf32>
    %66 = math.exp %65 : vector<128x128xf32>
    %cst_20 = arith.constant dense<0.000000e+00> : vector<128xf32>
    %67 = vector.multi_reduction <add>, %66, %cst_20 [0] : vector<128x128xf32> to vector<128xf32>
    %68 = vector.shape_cast %67 : vector<128xf32> to vector<1x128xf32>
    %69 = tpu.reciprocal %68 {approx = true} : vector<1x128xf32> -> vector<1x128xf32>
    %70 = arith.truncf %60 : vector<16x128xf32> to vector<16x128xbf16>
    %71 = arith.truncf %66 : vector<128x128xf32> to vector<128x128xbf16>
    %cst_21 = arith.constant dense<0.000000e+00> : vector<16x128xf32>
    %72 = tpu.matmul %70, %71, %cst_21 {dimension_numbers = #tpu.dot_dimension_numbers<[1], [0], [0], [1], [0, 0, 1, 1], [], []>} : vector<16x128xbf16>, vector<128x128xbf16>, vector<16x128xf32> -> vector<16x128xf32>
    %73 = vector.broadcast %69 : vector<1x128xf32> to vector<16x128xf32>
    %74 = arith.mulf %72, %73 : vector<16x128xf32>
    %75 = tpu.concatenate %23, %40, %57, %74 in 0 : vector<16x128xf32>, vector<16x128xf32>, vector<16x128xf32>, vector<16x128xf32> -> vector<64x128xf32>
    %c0_22 = arith.constant 0 : index
    %c0_23 = arith.constant 0 : index
    %c0_24 = arith.constant 0 : index
    %76 = vector.load %arg4[%c0_22, %c0_23, %c0_24] : memref<1x64x128xf32, #tpu.memory_space<vmem>>, vector<1x64x128xf32>
    %77 = vector.shape_cast %76 : vector<1x64x128xf32> to vector<64x128xf32>
    %78 = vector.shape_cast %75 : vector<64x128xf32> to vector<1x64x128xf32>
    tpu.vector_store %arg4[%c0_22, %c0_23, %c0_24], %78 {strides = array<i32>} : memref<1x64x128xf32, #tpu.memory_space<vmem>>, vector<1x64x128xf32>,
    return
  }
  func.func @transform_0(%arg0: i32) -> (i32, i32, i32) {
    %c0_i32 = arith.constant 0 : i32
    %c0_i32_0 = arith.constant 0 : i32
    %c0_i32_1 = arith.constant 0 : i32
    return %arg0, %c0_i32, %c0_i32_0 : i32, i32, i32
  }
  func.func @transform_1(%arg0: i32) -> (i32, i32) {
    %c0_i32 = arith.constant 0 : i32
    %c0_i32_0 = arith.constant 0 : i32
    %c0_i32_1 = arith.constant 0 : i32
    return %c0_i32, %c0_i32_0 : i32, i32
  }
  func.func @transform_2(%arg0: i32) -> (i32, i32) {
    %c0_i32 = arith.constant 0 : i32
    %c0_i32_0 = arith.constant 0 : i32
    %c0_i32_1 = arith.constant 0 : i32
    return %c0_i32, %c0_i32_0 : i32, i32
  }
  func.func @transform_3(%arg0: i32) -> (i32, i32, i32) {
    %c0_i32 = arith.constant 0 : i32
    %c0_i32_0 = arith.constant 0 : i32
    %c0_i32_1 = arith.constant 0 : i32
    return %arg0, %c0_i32, %c0_i32_0 : i32, i32, i32
  }
}

</mosaic_0001>

<llo_original>
// kernel: multihead_attn.1
$region0: #{multihead_attn.1}
  #allocation0 [shape = 'u32[]', space=smem, size = 0x4, offset = 0x4, fixed_abs, tag = 'smem constant byte address 0x4 - core index']
  #allocation1 [shape = 'u32[144,128]{1,0:T(1,128)}', space=vmem, size = 0x12000, scoped, tag = 'internal scratch']
  %s0 = inlined_call_operand.vmem [shape: f32[2,16,128], index: 0, kind: input, shape index: {}]
  %s1 = inlined_call_operand.vmem [shape: f32[128,16], index: 1, kind: input, shape index: {}]
  %s2 = inlined_call_operand.vmem [shape: f32[128,1], index: 2, kind: input, shape index: {}]
  %s3 = inlined_call_operand.hbm [shape: f32[2,64,128], index: 3, kind: output, shape index: {}]
  %s4 = sld [smem:[#allocation0]]
  $region45: #{multihead_attn.1} parent=0
    _
  %s6 = ssub.s32 1, %s4
  %s7 = scalar_select 0, %s6, %s4
  $region1: #{multihead_attn.1} parent=0
    #allocation2 [shape = 'u8[65536]{0}', space=vmem, size = 0x10000, scoped, tag = 'output window, operand 0']
    #allocation3 [shape = 's32[2]{0}', space=sflag, size = 0x8, scoped, tag = 'scoped memory for multihead_attn.1']
    %8 = vsyncpa [#allocation3], 0
    %s9 = scalar_lea.sflag [#allocation3], 1
    %10 = vsyncpa %s9, 0
    loop: start=0, step=1, limit=4
    $region2: #{multihead_attn.1} parent=1 // loop_pre_header
      _
    $region3: #{multihead_attn.1} parent=1 // loop_header
      %s12 = sphi 0, %s16
      %p13 = scmp.ge.s32.totalorder %s12, 4
      %s22 = sphi 0, %s24
      %s25 = sphi 0, %s22
      %s26 = sphi 0, %s25
      %s42 = sphi 0, %s26
      %s46 = sphi 0, %s46
      %s48 = sphi 0, %s46
      %s49 = sphi 0, %s48
      %s63 = sphi 0, %s49
      %s67 = sphi 0, %s67
      %s69 = sphi 0, %s67
      %s70 = sphi 0, %s69
      %s84 = sphi 0, %s70
      %s90 = sphi 0, %s92
      %s93 = sphi 0, %s90
      %s94 = sphi 0, %s93
      %s110 = sphi 0, %s94
    $region4: #{multihead_attn.1} parent=1 // loop_header_branch
      %15 = sbr.rel (%p13) target = $region8
    $region5: #{multihead_attn.1} parent=1 // loop_body
      %s17 = ssub.s32 %s12, 1
      %s18 = ssub.s32 %s12, 2
      %s19 = sadd.s32 %s12, 1
      %s20 = ssub.s32 %s12, %s19
      %p21 = scmp.eq.s32.totalorder %s20, 0
      %s23 = sadd.s32 %s22, 1
      %s24 = scalar_select %p21, %s22, %s23
      %p27 = pneg %p21
      %p28 = scmp.eq.s32.totalorder %s12, 1
      %p29 = por %p27, %p28
      %p30 = scmp.ne.s32.totalorder %s22, %s25
      %p31 = scmp.eq.s32.totalorder %s12, 0
      %p32 = por %p30, %p31
      %p33 = scmp.ne.s32.totalorder %s22, %s25
      %p34 = scmp.eq.s32.totalorder %s17, 1
      %p35 = por %p33, %p34
      %p36 = scmp.ne.s32.totalorder %s25, %s26
      %p37 = scmp.eq.s32.totalorder %s17, 0
      %p38 = por %p36, %p37
      %p39 = scmp.ne.s32.totalorder %s25, %s26
      %p40 = scmp.eq.s32.totalorder %s18, 1
      %p41 = por %p39, %p40
      %p43 = scmp.ne.s32.totalorder %s26, %s42
      %p44 = scmp.eq.s32.totalorder %s18, 0
      %p45 = por %p43, %p44
      %s47 = sadd.s32 %s46, 1
      %p50 = scmp.eq.s32.totalorder %s12, 1
      %p51 = scmp.ne.s32.totalorder %s46, %s48
      %p52 = scmp.eq.s32.totalorder %s12, 0
      %p53 = por %p51, %p52
      %p54 = scmp.ne.s32.totalorder %s46, %s48
      %p55 = scmp.eq.s32.totalorder %s17, 1
      %p56 = por %p54, %p55
      %p57 = scmp.ne.s32.totalorder %s48, %s49
      %p58 = scmp.eq.s32.totalorder %s17, 0
      %p59 = por %p57, %p58
      %p60 = scmp.ne.s32.totalorder %s48, %s49
      %p61 = scmp.eq.s32.totalorder %s18, 1
      %p62 = por %p60, %p61
      %p64 = scmp.ne.s32.totalorder %s49, %s63
      %p65 = scmp.eq.s32.totalorder %s18, 0
      %p66 = por %p64, %p65
      %s68 = sadd.s32 %s67, 1
      %p71 = scmp.eq.s32.totalorder %s12, 1
      %p72 = scmp.ne.s32.totalorder %s67, %s69
      %p73 = scmp.eq.s32.totalorder %s12, 0
      %p74 = por %p72, %p73
      %p75 = scmp.ne.s32.totalorder %s67, %s69
      %p76 = scmp.eq.s32.totalorder %s17, 1
      %p77 = por %p75, %p76
      %p78 = scmp.ne.s32.totalorder %s69, %s70
      %p79 = scmp.eq.s32.totalorder %s17, 0
      %p80 = por %p78, %p79
      %p81 = scmp.ne.s32.totalorder %s69, %s70
      %p82 = scmp.eq.s32.totalorder %s18, 1
      %p83 = por %p81, %p82
      %p85 = scmp.ne.s32.totalorder %s70, %s84
      %p86 = scmp.eq.s32.totalorder %s18, 0
      %p87 = por %p85, %p86
      %s88 = ssub.s32 %s12, %s19
      %p89 = scmp.eq.s32.totalorder %s88, 0
      %s91 = sadd.s32 %s90, 1
      %s92 = scalar_select %p89, %s90, %s91
      %p95 = pneg %p89
      %p96 = scmp.eq.s32.totalorder %s12, 1
      %p97 = por %p95, %p96
      %p98 = scmp.ne.s32.totalorder %s90, %s93
      %p99 = scmp.eq.s32.totalorder %s12, 0
      %p100 = por %p98, %p99
      %p101 = scmp.ne.s32.totalorder %s90, %s93
      %p102 = scmp.eq.s32.totalorder %s17, 1
      %p103 = por %p101, %p102
      %p104 = scmp.ne.s32.totalorder %s93, %s94
      %p105 = scmp.eq.s32.totalorder %s17, 0
      %p106 = por %p104, %p105
      %p107 = scmp.ne.s32.totalorder %s93, %s94
      %p108 = scmp.eq.s32.totalorder %s18, 1
      %p109 = por %p107, %p108
      %p111 = scmp.ne.s32.totalorder %s94, %s110
      %p112 = scmp.eq.s32.totalorder %s18, 0
      %p113 = por %p111, %p112
      %p114 = scmp.le.s32.totalorder 1, %s12
      %p115 = scmp.lt.s32.totalorder %s12, 3
      %p116 = pnand %p114, %p115
      %p117 = pneg %p116
      // Predicated region
      $region9: #{multihead_attn.1} parent=5 // pred_check
        _
      $region10: #{multihead_attn.1} parent=5 // pred_check_branch
        %119 = sbr.rel (%p116) target = $region12
      $region11: #{multihead_attn.1} parent=5 // pred_region
        %s120 = ssub.s32 %s12, 1
        // Predicated region
        $region13: #{multihead_attn.1} parent=11 // pred_check
          %p121 = pneg %p59
        $region14: #{multihead_attn.1} parent=11 // pred_check_branch
          %123 = sbr.rel (%p121) target = $region16
        $region15: #{multihead_attn.1} parent=11 // pred_region
          _
        $region16: #{multihead_attn.1} parent=11 // pred_fallthru
          _
        // Predicated region
        $region17: #{multihead_attn.1} parent=11 // pred_check
          %p124 = pneg %p80
        $region18: #{multihead_attn.1} parent=11 // pred_check_branch
          %126 = sbr.rel (%p124) target = $region20
        $region19: #{multihead_attn.1} parent=11 // pred_region
          _
        $region20: #{multihead_attn.1} parent=11 // pred_fallthru
          _
      $region12: #{multihead_attn.1} parent=5 // pred_fallthru
        _
      %p127 = scmp.lt.s32.totalorder %s12, 2
      // Predicated region
      $region21: #{multihead_attn.1} parent=5 // pred_check
        %p128 = pneg %p127
      $region22: #{multihead_attn.1} parent=5 // pred_check_branch
        %130 = sbr.rel (%p128) target = $region24
      $region23: #{multihead_attn.1} parent=5 // pred_region
        // Predicated region
        $region25: #{multihead_attn.1} parent=23 // pred_check
          %p131 = pneg %p32
        $region26: #{multihead_attn.1} parent=23 // pred_check_branch
          %133 = sbr.rel (%p131) target = $region28
        $region27: #{multihead_attn.1} parent=23 // pred_region
          %p134 = scmp.lt.s32.totalorder %s12, 1
          %s135 = scalar_select %p134, %s12, 1
          %s136 = smul.addr %s135, 2
          %s137 = smul.addr %s136, 8
          %s138 = scalar_lea.vmem %s0, %s137
        $region28: #{multihead_attn.1} parent=23 // pred_fallthru
          _
      $region24: #{multihead_attn.1} parent=5 // pred_fallthru
        _
      %p139 = scmp.le.s32.totalorder 1, %s12
      %p140 = scmp.lt.s32.totalorder %s12, 3
      %p141 = pnand %p139, %p140
      %p142 = pneg %p141
      // Predicated region
      $region29: #{multihead_attn.1} parent=5 // pred_check
        _
      $region30: #{multihead_attn.1} parent=5 // pred_check_branch
        %144 = sbr.rel (%p141) target = $region32
      $region31: #{multihead_attn.1} parent=5 // pred_region
        %s145 = ssub.s32 %s12, 1
        %p146 = scmp.lt.s32.totalorder %s17, 1
        %s147 = scalar_select %p146, %s17, 1
        %s148 = smul.addr %s147, 2
        %s149 = smul.addr %s148, 8
        %s150 = scalar_lea.vmem %s0, %s149
        %p151 = pneg %p38
        %p152 = pneg %p35
        %p153 = pneg %p59
        %p154 = pneg %p56
        %p155 = pneg %p80
        %p156 = pneg %p77
        %p157 = pneg %p106
        %p158 = pneg %p103
        %s159 = sand.u32 %s93, 1
        %s160 = scalar_lea.sflag [#allocation3], %s159
        %s161 = sand.u32 %s93, 1
        %s162 = smul.addr %s161, 64
        %s163 = scalar_lea.vmem [#allocation2], %s162
        %p164 = scmp.lt.s32.totalorder %s17, 1
        %s165 = scalar_select %p164, %s17, 1
        %s166 = smul.addr %s165, 2
        %s167 = smul.addr %s166, 8
        %s168 = scalar_lea.vmem %s0, %s167
        %v170 = vld [vmem:[%s168] sm:$0xff]
        %v171 = vld [vmem:[%s168 + $0x8] sm:$0xff]
        %v172 = vld [vmem:[%s1] sm:$0xff]
        %v173 = vld [vmem:[%s1 + $0x8] sm:$0xff]
        %v174 = vld [vmem:[%s1 + $0x10] sm:$0xff]
        %v175 = vld [vmem:[%s1 + $0x18] sm:$0xff]
        %v176 = vld [vmem:[%s1 + $0x20] sm:$0xff]
        %v177 = vld [vmem:[%s1 + $0x28] sm:$0xff]
        %v178 = vld [vmem:[%s1 + $0x30] sm:$0xff]
        %v179 = vld [vmem:[%s1 + $0x38] sm:$0xff]
        %v180 = vld [vmem:[%s1 + $0x40] sm:$0xff]
        %v181 = vld [vmem:[%s1 + $0x48] sm:$0xff]
        %v182 = vld [vmem:[%s1 + $0x50] sm:$0xff]
        %v183 = vld [vmem:[%s1 + $0x58] sm:$0xff]
        %v184 = vld [vmem:[%s1 + $0x60] sm:$0xff]
        %v185 = vld [vmem:[%s1 + $0x68] sm:$0xff]
        %v186 = vld [vmem:[%s1 + $0x70] sm:$0xff]
        %v187 = vld [vmem:[%s1 + $0x78] sm:$0xff]
        %v188 = vld [vmem:[%s2] sm:$0xff]
        %v189 = vld [vmem:[%s2 + $0x8] sm:$0xff]
        %v190 = vld [vmem:[%s2 + $0x10] sm:$0xff]
        %v191 = vld [vmem:[%s2 + $0x18] sm:$0xff]
        %v192 = vld [vmem:[%s2 + $0x20] sm:$0xff]
        %v193 = vld [vmem:[%s2 + $0x28] sm:$0xff]
        %v194 = vld [vmem:[%s2 + $0x30] sm:$0xff]
        %v195 = vld [vmem:[%s2 + $0x38] sm:$0xff]
        %v196 = vld [vmem:[%s2 + $0x40] sm:$0xff]
        %v197 = vld [vmem:[%s2 + $0x48] sm:$0xff]
        %v198 = vld [vmem:[%s2 + $0x50] sm:$0xff]
        %v199 = vld [vmem:[%s2 + $0x58] sm:$0xff]
        %v200 = vld [vmem:[%s2 + $0x60] sm:$0xff]
        %v201 = vld [vmem:[%s2 + $0x68] sm:$0xff]
        %v202 = vld [vmem:[%s2 + $0x70] sm:$0xff]
        %v203 = vld [vmem:[%s2 + $0x78] sm:$0xff]
        %205 = vset.pattern.permute.xlu0 0
        %206 = vperm.xlu0 %205, %v188
        %v207 = vpop.permute.xlu0 %206
        %210 = vset.pattern.permute.xlu0 0
        %211 = vperm.xlu0 %210, %v189
        %v212 = vpop.permute.xlu0 %211
        %215 = vset.pattern.permute.xlu0 0
        %216 = vperm.xlu0 %215, %v190
        %v217 = vpop.permute.xlu0 %216
        %220 = vset.pattern.permute.xlu0 0
        %221 = vperm.xlu0 %220, %v191
        %v222 = vpop.permute.xlu0 %221
        %225 = vset.pattern.permute.xlu0 0
        %226 = vperm.xlu0 %225, %v192
        %v227 = vpop.permute.xlu0 %226
        %230 = vset.pattern.permute.xlu0 0
        %231 = vperm.xlu0 %230, %v193
        %v232 = vpop.permute.xlu0 %231
        %235 = vset.pattern.permute.xlu0 0
        %236 = vperm.xlu0 %235, %v194
        %v237 = vpop.permute.xlu0 %236
        %240 = vset.pattern.permute.xlu0 0
        %241 = vperm.xlu0 %240, %v195
        %v242 = vpop.permute.xlu0 %241
        %245 = vset.pattern.permute.xlu0 0
        %246 = vperm.xlu0 %245, %v196
        %v247 = vpop.permute.xlu0 %246
        %250 = vset.pattern.permute.xlu0 0
        %251 = vperm.xlu0 %250, %v197
        %v252 = vpop.permute.xlu0 %251
        %255 = vset.pattern.permute.xlu0 0
        %256 = vperm.xlu0 %255, %v198
        %v257 = vpop.permute.xlu0 %256
        %260 = vset.pattern.permute.xlu0 0
        %261 = vperm.xlu0 %260, %v199
        %v262 = vpop.permute.xlu0 %261
        %265 = vset.pattern.permute.xlu0 0
        %266 = vperm.xlu0 %265, %v200
        %v267 = vpop.permute.xlu0 %266
        %270 = vset.pattern.permute.xlu0 0
        %271 = vperm.xlu0 %270, %v201
        %v272 = vpop.permute.xlu0 %271
        %275 = vset.pattern.permute.xlu0 0
        %276 = vperm.xlu0 %275, %v202
        %v277 = vpop.permute.xlu0 %276
        %280 = vset.pattern.permute.xlu0 0
        %281 = vperm.xlu0 %280, %v203
        %v282 = vpop.permute.xlu0 %281
        %vm284 = vcmask 130048
        %v286 = vsel %vm284, %v172, 0
        %v289 = vsel %vm284, %v173, 0
        %v292 = vsel %vm284, %v174, 0
        %v295 = vsel %vm284, %v175, 0
        %v298 = vsel %vm284, %v176, 0
        %v301 = vsel %vm284, %v177, 0
        %v304 = vsel %vm284, %v178, 0
        %v307 = vsel %vm284, %v179, 0
        %v310 = vsel %vm284, %v180, 0
        %v313 = vsel %vm284, %v181, 0
        %v316 = vsel %vm284, %v182, 0
        %v319 = vsel %vm284, %v183, 0
        %v322 = vsel %vm284, %v184, 0
        %v325 = vsel %vm284, %v185, 0
        %v328 = vsel %vm284, %v186, 0
        %v331 = vsel %vm284, %v187, 0
        %333 = vmatprep.subr.mxu0 0.0
        %334 = vmatpush1.msra.mxu0 %v170
        %335 = vmatprep.subr.mxu0 0.0
        %336 = vmatpush1.msra.mxu0 %v171
        %337 = vmatprep.subr.mxu0 0.0
        %338 = vmatpush1.msra.mxu0 0.0
        %339 = vmatprep.subr.mxu0 0.0
        %340 = vmatpush1.msra.mxu0 0.0
        %341 = vmatprep.subr.mxu0 0.0
        %342 = vmatpush1.msra.mxu0 0.0
        %343 = vmatprep.subr.mxu0 0.0
        %344 = vmatpush1.msra.mxu0 0.0
        %345 = vmatprep.subr.mxu0 0.0
        %346 = vmatpush1.msra.mxu0 0.0
        %347 = vmatprep.subr.mxu0 0.0
        %348 = vmatpush1.msra.mxu0 0.0
        %349 = vmatprep.subr.mxu0 0.0
        %350 = vmatpush1.msra.mxu0 0.0
        %351 = vmatprep.subr.mxu0 0.0
        %352 = vmatpush1.msra.mxu0 0.0
        %353 = vmatprep.subr.mxu0 0.0
        %354 = vmatpush1.msra.mxu0 0.0
        %355 = vmatprep.subr.mxu0 0.0
        %356 = vmatpush1.msra.mxu0 0.0
        %357 = vmatprep.subr.mxu0 0.0
        %358 = vmatpush1.msra.mxu0 0.0
        %359 = vmatprep.subr.mxu0 0.0
        %360 = vmatpush1.msra.mxu0 0.0
        %361 = vmatprep.subr.mxu0 0.0
        %362 = vmatpush1.msra.mxu0 0.0
        %363 = vmatprep.subr.mxu0 0.0
        %364 = vmatpush1.msra.mxu0 0.0
        %365 = vmatprep.subr.mxu0 0.0
        %366 = vmatpush1.msra.mxu0 0.0
        %367 = vmatprep.subr.mxu0 0.0
        %368 = vmatpush1.msra.mxu0 0.0
        %369 = vmatprep.subr.mxu0 0.0
        %370 = vmatpush1.msra.mxu0 0.0
        %371 = vmatprep.subr.mxu0 0.0
        %372 = vmatpush1.msra.mxu0 0.0
        %373 = vmatprep.subr.mxu0 0.0
        %374 = vmatpush1.msra.mxu0 0.0
        %375 = vmatprep.subr.mxu0 0.0
        %376 = vmatpush1.msra.mxu0 0.0
        %377 = vmatprep.subr.mxu0 0.0
        %378 = vmatpush1.msra.mxu0 0.0
        %379 = vmatprep.subr.mxu0 0.0
        %380 = vmatpush1.msra.mxu0 0.0
        %381 = vmatprep.subr.mxu0 0.0
        %382 = vmatpush1.msra.mxu0 0.0
        %383 = vmatprep.subr.mxu0 0.0
        %384 = vmatpush1.msra.mxu0 0.0
        %385 = vmatprep.subr.mxu0 0.0
        %386 = vmatpush1.msra.mxu0 0.0
        %387 = vmatprep.subr.mxu0 0.0
        %388 = vmatpush1.msra.mxu0 0.0
        %389 = vmatprep.subr.mxu0 0.0
        %390 = vmatpush1.msra.mxu0 0.0
        %391 = vmatprep.subr.mxu0 0.0
        %392 = vmatpush1.msra.mxu0 0.0
        %393 = vmatprep.subr.mxu0 0.0
        %394 = vmatpush1.msra.mxu0 0.0
        %395 = vmatprep.subr.mxu0 0.0
        %396 = vmatpush1.msra.mxu0 0.0
        %397 = vmatprep.mubr.f32.mxu0 0.0
        %398 = vmatmul.mubr.f32.gmra.mrb[0].mxu0 %v286
        %v399 = vpop.f32.mrb[0].mxu0
        %v400 = vadd.f32 %v207, %v399
        %v401 = vpop.f32.mrb[0].mxu0
        %402 = vmatprep.mubr.f32.mxu0 0.0
        %403 = vmatmul.mubr.f32.gmra.mrb[0].mxu0 %v289
        %v404 = vpop.f32.mrb[0].mxu0
        %v405 = vadd.f32 %v212, %v404
        %v406 = vpop.f32.mrb[0].mxu0
        %407 = vmatprep.mubr.f32.mxu0 0.0
        %408 = vmatmul.mubr.f32.gmra.mrb[0].mxu0 %v292
        %v409 = vpop.f32.mrb[0].mxu0
        %v410 = vadd.f32 %v217, %v409
        %v411 = vpop.f32.mrb[0].mxu0
        %412 = vmatprep.mubr.f32.mxu0 0.0
        %413 = vmatmul.mubr.f32.gmra.mrb[0].mxu0 %v295
        %v414 = vpop.f32.mrb[0].mxu0
        %v415 = vadd.f32 %v222, %v414
        %v416 = vpop.f32.mrb[0].mxu0
        %417 = vmatprep.mubr.f32.mxu0 0.0
        %418 = vmatmul.mubr.f32.gmra.mrb[0].mxu0 %v298
        %v419 = vpop.f32.mrb[0].mxu0
        %v420 = vadd.f32 %v227, %v419
        %v421 = vpop.f32.mrb[0].mxu0
        %422 = vmatprep.mubr.f32.mxu0 0.0
        %423 = vmatmul.mubr.f32.gmra.mrb[0].mxu0 %v301
        %v424 = vpop.f32.mrb[0].mxu0
        %v425 = vadd.f32 %v232, %v424
        %v426 = vpop.f32.mrb[0].mxu0
        %427 = vmatprep.mubr.f32.mxu0 0.0
        %428 = vmatmul.mubr.f32.gmra.mrb[0].mxu0 %v304
        %v429 = vpop.f32.mrb[0].mxu0
        %v430 = vadd.f32 %v237, %v429
        %v431 = vpop.f32.mrb[0].mxu0
        %432 = vmatprep.mubr.f32.mxu0 0.0
        %433 = vmatmul.mubr.f32.gmra.mrb[0].mxu0 %v307
        %v434 = vpop.f32.mrb[0].mxu0
        %v435 = vadd.f32 %v242, %v434
        %v436 = vpop.f32.mrb[0].mxu0
        %437 = vmatprep.mubr.f32.mxu0 0.0
        %438 = vmatmul.mubr.f32.gmra.mrb[0].mxu0 %v310
        %v439 = vpop.f32.mrb[0].mxu0
        %v440 = vadd.f32 %v247, %v439
        %v441 = vpop.f32.mrb[0].mxu0
        %442 = vmatprep.mubr.f32.mxu0 0.0
        %443 = vmatmul.mubr.f32.gmra.mrb[0].mxu0 %v313
        %v444 = vpop.f32.mrb[0].mxu0
        %v445 = vadd.f32 %v252, %v444
        %v446 = vpop.f32.mrb[0].mxu0
        %447 = vmatprep.mubr.f32.mxu0 0.0
        %448 = vmatmul.mubr.f32.gmra.mrb[0].mxu0 %v316
        %v449 = vpop.f32.mrb[0].mxu0
        %v450 = vadd.f32 %v257, %v449
        %v451 = vpop.f32.mrb[0].mxu0
        %452 = vmatprep.mubr.f32.mxu0 0.0
        %453 = vmatmul.mubr.f32.gmra.mrb[0].mxu0 %v319
        %v454 = vpop.f32.mrb[0].mxu0
        %v455 = vadd.f32 %v262, %v454
        %v456 = vpop.f32.mrb[0].mxu0
        %457 = vmatprep.mubr.f32.mxu0 0.0
        %458 = vmatmul.mubr.f32.gmra.mrb[0].mxu0 %v322
        %v459 = vpop.f32.mrb[0].mxu0
        %v460 = vadd.f32 %v267, %v459
        %v461 = vpop.f32.mrb[0].mxu0
        %462 = vmatprep.mubr.f32.mxu0 0.0
        %463 = vmatmul.mubr.f32.gmra.mrb[0].mxu0 %v325
        %v464 = vpop.f32.mrb[0].mxu0
        %v465 = vadd.f32 %v272, %v464
        %v466 = vpop.f32.mrb[0].mxu0
        %467 = vmatprep.mubr.f32.mxu0 0.0
        %468 = vmatmul.mubr.f32.gmra.mrb[0].mxu0 %v328
        %v469 = vpop.f32.mrb[0].mxu0
        %v470 = vadd.f32 %v277, %v469
        %v471 = vpop.f32.mrb[0].mxu0
        %472 = vmatprep.mubr.f32.mxu0 0.0
        %473 = vmatmul.mubr.f32.gmra.mrb[0].mxu0 %v331
        %v474 = vpop.f32.mrb[0].mxu0
        %v475 = vadd.f32 %v282, %v474
        %v476 = vpop.f32.mrb[0].mxu0
        %477 = vdwg.mxu0
        %478 = vxpose.xlu0.b32.start [1/16] %v420, 128
        %479 = vxpose.xlu0.b32.cont [2/16] 0.0, 128
        %480 = vxpose.xlu0.b32.cont [3/16] 0.0, 128
        %481 = vxpose.xlu0.b32.cont [4/16] 0.0, 128
        %482 = vxpose.xlu0.b32.cont [5/16] 0.0, 128
        %483 = vxpose.xlu0.b32.cont [6/16] 0.0, 128
        %484 = vxpose.xlu0.b32.cont [7/16] 0.0, 128
        %485 = vxpose.xlu0.b32.cont [8/16] 0.0, 128
        %486 = vxpose.xlu0.b32.cont [9/16] 0.0, 128
        %487 = vxpose.xlu0.b32.cont [10/16] 0.0, 128
        %488 = vxpose.xlu0.b32.cont [11/16] 0.0, 128
        %489 = vxpose.xlu0.b32.cont [12/16] 0.0, 128
        %490 = vxpose.xlu0.b32.cont [13/16] 0.0, 128
        %491 = vxpose.xlu0.b32.cont [14/16] 0.0, 128
        %492 = vxpose.xlu0.b32.cont [15/16] 0.0, 128
        %493 = vxpose.xlu0.b32.end [16/16] 0.0, 128
        %v494 = vpop.trf.xlu0
        %v495 = vpop.trf.xlu0
        %v496 = vpop.trf.xlu0
        %v497 = vpop.trf.xlu0
        %v498 = vpop.trf.xlu0
        %v499 = vpop.trf.xlu0
        %v500 = vpop.trf.xlu0
        %v501 = vpop.trf.xlu0
        %v502 = vpop.trf.xlu0
        %v503 = vpop.trf.xlu0
        %v504 = vpop.trf.xlu0
        %v505 = vpop.trf.xlu0
        %v506 = vpop.trf.xlu0
        %v507 = vpop.trf.xlu0
        %v508 = vpop.trf.xlu0
        %v509 = vpop.trf.xlu0
        %vm510 = vcmask 64512
        %v512 = vsel %vm510, %v494, 0
        %v515 = vsel %vm510, %v495, 0
        %v518 = vsel %vm510, %v496, 0
        %v521 = vsel %vm510, %v497, 0
        %v524 = vsel %vm510, %v498, 0
        %v527 = vsel %vm510, %v499, 0
        %v530 = vsel %vm510, %v500, 0
        %v533 = vsel %vm510, %v501, 0
        %v536 = vsel %vm510, %v502, 0
        %v539 = vsel %vm510, %v503, 0
        %v542 = vsel %vm510, %v504, 0
        %v545 = vsel %vm510, %v505, 0
        %v548 = vsel %vm510, %v506, 0
        %v551 = vsel %vm510, %v507, 0
        %v554 = vsel %vm510, %v508, 0
        %v557 = vsel %vm510, %v509, 0
        %559 = vmatprep.subr.mxu0 0.0
        %560 = vmatpush1.msra.mxu0 %v400
        %561 = vmatprep.subr.mxu0 0.0
        %562 = vmatpush1.msra.mxu0 0.0
        %563 = vmatprep.subr.mxu0 0.0
        %564 = vmatpush1.msra.mxu0 0.0
        %565 = vmatprep.subr.mxu0 0.0
        %566 = vmatpush1.msra.mxu0 0.0
        %567 = vmatprep.subr.mxu0 0.0
        %568 = vmatpush1.msra.mxu0 0.0
        %569 = vmatprep.subr.mxu0 0.0
        %570 = vmatpush1.msra.mxu0 0.0
        %571 = vmatprep.subr.mxu0 0.0
        %572 = vmatpush1.msra.mxu0 0.0
        %573 = vmatprep.subr.mxu0 0.0
        %574 = vmatpush1.msra.mxu0 0.0
        %575 = vmatprep.subr.mxu0 0.0
        %576 = vmatpush1.msra.mxu0 0.0
        %577 = vmatprep.subr.mxu0 0.0
        %578 = vmatpush1.msra.mxu0 0.0
        %579 = vmatprep.subr.mxu0 0.0
        %580 = vmatpush1.msra.mxu0 0.0
        %581 = vmatprep.subr.mxu0 0.0
        %582 = vmatpush1.msra.mxu0 0.0
        %583 = vmatprep.subr.mxu0 0.0
        %584 = vmatpush1.msra.mxu0 0.0
        %585 = vmatprep.subr.mxu0 0.0
        %586 = vmatpush1.msra.mxu0 0.0
        %587 = vmatprep.subr.mxu0 0.0
        %588 = vmatpush1.msra.mxu0 0.0
        %589 = vmatprep.subr.mxu0 0.0
        %590 = vmatpush1.msra.mxu0 0.0
        %591 = vmatprep.subr.mxu0 0.0
        %592 = vmatpush1.msra.mxu0 0.0
        %593 = vmatprep.subr.mxu0 0.0
        %594 = vmatpush1.msra.mxu0 0.0
        %595 = vmatprep.subr.mxu0 0.0
        %596 = vmatpush1.msra.mxu0 0.0
        %597 = vmatprep.subr.mxu0 0.0
        %598 = vmatpush1.msra.mxu0 0.0
        %599 = vmatprep.subr.mxu0 0.0
        %600 = vmatpush1.msra.mxu0 0.0
        %601 = vmatprep.subr.mxu0 0.0
        %602 = vmatpush1.msra.mxu0 0.0
        %603 = vmatprep.subr.mxu0 0.0
        %604 = vmatpush1.msra.mxu0 0.0
        %605 = vmatprep.subr.mxu0 0.0
        %606 = vmatpush1.msra.mxu0 0.0
        %607 = vmatprep.subr.mxu0 0.0
        %608 = vmatpush1.msra.mxu0 0.0
        %609 = vmatprep.subr.mxu0 0.0
        %610 = vmatpush1.msra.mxu0 0.0
        %611 = vmatprep.subr.mxu0 0.0
        %612 = vmatpush1.msra.mxu0 0.0
        %613 = vmatprep.subr.mxu0 0.0
        %614 = vmatpush1.msra.mxu0 0.0
        %615 = vmatprep.subr.mxu0 0.0
        %616 = vmatpush1.msra.mxu0 0.0
        %617 = vmatprep.subr.mxu0 0.0
        %618 = vmatpush1.msra.mxu0 0.0
        %619 = vmatprep.subr.mxu0 0.0
        %620 = vmatpush1.msra.mxu0 0.0
        %621 = vmatprep.subr.mxu0 0.0
        %622 = vmatpush1.msra.mxu0 0.0
        %623 = vmatprep.mubr.f32.mxu0 0.0
        %624 = vmatmul.mubr.f32.gmra.mrb[0].mxu0 %v512
        %v625 = vpop.f32.mrb[0].mxu0
        %v626 = vadd.f32 0.0, %v625
        %v627 = vpop.f32.mrb[0].mxu0
        %628 = vmatprep.mubr.f32.mxu0 0.0
        %629 = vmatmul.mubr.f32.gmra.mrb[0].mxu0 %v515
        %v630 = vpop.f32.mrb[0].mxu0
        %v631 = vadd.f32 0.0, %v630
        %v632 = vpop.f32.mrb[0].mxu0
        %633 = vmatprep.mubr.f32.mxu0 0.0
        %634 = vmatmul.mubr.f32.gmra.mrb[0].mxu0 %v518
        %v635 = vpop.f32.mrb[0].mxu0
        %v636 = vadd.f32 0.0, %v635
        %v637 = vpop.f32.mrb[0].mxu0
        %638 = vmatprep.mubr.f32.mxu0 0.0
        %639 = vmatmul.mubr.f32.gmra.mrb[0].mxu0 %v521
        %v640 = vpop.f32.mrb[0].mxu0
        %v641 = vadd.f32 0.0, %v640
        %v642 = vpop.f32.mrb[0].mxu0
        %643 = vmatprep.mubr.f32.mxu0 0.0
        %644 = vmatmul.mubr.f32.gmra.mrb[0].mxu0 %v524
        %v645 = vpop.f32.mrb[0].mxu0
        %v646 = vadd.f32 0.0, %v645
        %v647 = vpop.f32.mrb[0].mxu0
        %648 = vmatprep.mubr.f32.mxu0 0.0
        %649 = vmatmul.mubr.f32.gmra.mrb[0].mxu0 %v527
        %v650 = vpop.f32.mrb[0].mxu0
        %v651 = vadd.f32 0.0, %v650
        %v652 = vpop.f32.mrb[0].mxu0
        %653 = vmatprep.mubr.f32.mxu0 0.0
        %654 = vmatmul.mubr.f32.gmra.mrb[0].mxu0 %v530
        %v655 = vpop.f32.mrb[0].mxu0
        %v656 = vadd.f32 0.0, %v655
        %v657 = vpop.f32.mrb[0].mxu0
        %658 = vmatprep.mubr.f32.mxu0 0.0
        %659 = vmatmul.mubr.f32.gmra.mrb[0].mxu0 %v533
        %v660 = vpop.f32.mrb[0].mxu0
        %v661 = vadd.f32 0.0, %v660
        %v662 = vpop.f32.mrb[0].mxu0
        %663 = vmatprep.mubr.f32.mxu0 0.0
        %664 = vmatmul.mubr.f32.gmra.mrb[0].mxu0 %v536
        %v665 = vpop.f32.mrb[0].mxu0
        %v666 = vadd.f32 0.0, %v665
        %v667 = vpop.f32.mrb[0].mxu0
        %668 = vmatprep.mubr.f32.mxu0 0.0
        %669 = vmatmul.mubr.f32.gmra.mrb[0].mxu0 %v539
        %v670 = vpop.f32.mrb[0].mxu0
        %v671 = vadd.f32 0.0, %v670
        %v672 = vpop.f32.mrb[0].mxu0
        %673 = vmatprep.mubr.f32.mxu0 0.0
        %674 = vmatmul.mubr.f32.gmra.mrb[0].mxu0 %v542
        %v675 = vpop.f32.mrb[0].mxu0
        %v676 = vadd.f32 0.0, %v675
        %v677 = vpop.f32.mrb[0].mxu0
        %678 = vmatprep.mubr.f32.mxu0 0.0
        %679 = vmatmul.mubr.f32.gmra.mrb[0].mxu0 %v545
        %v680 = vpop.f32.mrb[0].mxu0
        %v681 = vadd.f32 0.0, %v680
        %v682 = vpop.f32.mrb[0].mxu0
        %683 = vmatprep.mubr.f32.mxu0 0.0
        %684 = vmatmul.mubr.f32.gmra.mrb[0].mxu0 %v548
        %v685 = vpop.f32.mrb[0].mxu0
        %v686 = vadd.f32 0.0, %v685
        %v687 = vpop.f32.mrb[0].mxu0
        %688 = vmatprep.mubr.f32.mxu0 0.0
        %689 = vmatmul.mubr.f32.gmra.mrb[0].mxu0 %v551
        %v690 = vpop.f32.mrb[0].mxu0
        %v691 = vadd.f32 0.0, %v690
        %v692 = vpop.f32.mrb[0].mxu0
        %693 = vmatprep.mubr.f32.mxu0 0.0
        %694 = vmatmul.mubr.f32.gmra.mrb[0].mxu0 %v554
        %v695 = vpop.f32.mrb[0].mxu0
        %v696 = vadd.f32 0.0, %v695
        %v697 = vpop.f32.mrb[0].mxu0
        %698 = vmatprep.mubr.f32.mxu0 0.0
        %699 = vmatmul.mubr.f32.gmra.mrb[0].mxu0 %v557
        %v700 = vpop.f32.mrb[0].mxu0
        %v701 = vadd.f32 0.0, %v700
        %v702 = vpop.f32.mrb[0].mxu0
        %703 = vdwg.mxu0
        %v704 = vmax.f32 %v626, %v646
        %v705 = vmax.f32 %v631, %v651
        %v706 = vmax.f32 %v636, %v656
        %v707 = vmax.f32 %v641, %v661
        %v708 = vmax.f32 %v704, %v666
        %v709 = vmax.f32 %v705, %v671
        %v710 = vmax.f32 %v706, %v676
        %v711 = vmax.f32 %v707, %v681
        %v712 = vmax.f32 %v708, %v686
        %v713 = vmax.f32 %v709, %v691
        %v714 = vmax.f32 %v710, %v696
        %v715 = vmax.f32 %v711, %v701
        %v716 = vmax.f32 %v712, %v713
        %v717 = vmax.f32 %v714, %v715
        %v718 = vmax.f32 %v716, %v717
        %v719 = vrot.slane %v718, 4
        %v720 = vmax.f32 %v718, %v719
        %v721 = vrot.slane %v720, 2
        %v722 = vmax.f32 %v720, %v721
        %v723 = vrot.slane %v722, 1
        %v724 = vmax.f32 %v722, %v723
        %v725 = vsub.f32 %v626, %v724
        %v726 = vsub.f32 %v631, %v724
        %v727 = vsub.f32 %v636, %v724
        %v728 = vsub.f32 %v641, %v724
        %v729 = vsub.f32 %v646, %v724
        %v730 = vsub.f32 %v651, %v724
        %v731 = vsub.f32 %v656, %v724
        %v732 = vsub.f32 %v661, %v724
        %v733 = vsub.f32 %v666, %v724
        %v734 = vsub.f32 %v671, %v724
        %v735 = vsub.f32 %v676, %v724
        %v736 = vsub.f32 %v681, %v724
        %v737 = vsub.f32 %v686, %v724
        %v738 = vsub.f32 %v691, %v724
        %v739 = vsub.f32 %v696, %v724
        %v740 = vsub.f32 %v701, %v724
        %v741 = vmul.f32 %v725, 1.442695
        %v742 = vpow.pop %v741
        %v743 = vmul.f32 %v726, 1.442695
        %v744 = vpow.pop %v743
        %v745 = vmul.f32 %v727, 1.442695
        %v746 = vpow.pop %v745
        %v747 = vmul.f32 %v728, 1.442695
        %v748 = vpow.pop %v747
        %v749 = vmul.f32 %v729, 1.442695
        %v750 = vpow.pop %v749
        %v751 = vmul.f32 %v730, 1.442695
        %v752 = vpow.pop %v751
        %v753 = vmul.f32 %v731, 1.442695
        %v754 = vpow.pop %v753
        %v755 = vmul.f32 %v732, 1.442695
        %v756 = vpow.pop %v755
        %v757 = vmul.f32 %v733, 1.442695
        %v758 = vpow.pop %v757
        %v759 = vmul.f32 %v734, 1.442695
        %v760 = vpow.pop %v759
        %v761 = vmul.f32 %v735, 1.442695
        %v762 = vpow.pop %v761
        %v763 = vmul.f32 %v736, 1.442695
        %v764 = vpow.pop %v763
        %v765 = vmul.f32 %v737, 1.442695
        %v766 = vpow.pop %v765
        %v767 = vmul.f32 %v738, 1.442695
        %v768 = vpow.pop %v767
        %v769 = vmul.f32 %v739, 1.442695
        %v770 = vpow.pop %v769
        %v771 = vmul.f32 %v740, 1.442695
        %v772 = vpow.pop %v771
        %v773 = vadd.f32 %v742, %v744
        %v774 = vadd.f32 %v773, %v746
        %v775 = vadd.f32 %v774, %v748
        %v776 = vadd.f32 %v775, %v750
        %v777 = vadd.f32 %v776, %v752
        %v778 = vadd.f32 %v777, %v754
        %v779 = vadd.f32 %v778, %v756
        %v780 = vadd.f32 %v779, %v758
        %v781 = vadd.f32 %v780, %v760
        %v782 = vadd.f32 %v781, %v762
        %v783 = vadd.f32 %v782, %v764
        %v784 = vadd.f32 %v783, %v766
        %v785 = vadd.f32 %v784, %v768
        %v786 = vadd.f32 %v785, %v770
        %v787 = vadd.f32 %v786, %v772
        %v788 = vrot.slane %v787, 4
        %v789 = vadd.f32 %v787, %v788
        %v790 = vrot.slane %v789, 2
        %v791 = vadd.f32 %v789, %v790
        %v792 = vrot.slane %v791, 1
        %v793 = vadd.f32 %v791, %v792
        %v794 = vrcp.pop %v793
        %v795 = vpack.c.bf16 %v445, %v440
        %v796 = vpack.c.bf16 %v744, %v742
        %v797 = vpack.c.bf16 %v748, %v746
        %v798 = vpack.c.bf16 %v752, %v750
        %v799 = vpack.c.bf16 %v756, %v754
        %v800 = vpack.c.bf16 %v760, %v758
        %v801 = vpack.c.bf16 %v764, %v762
        %v802 = vpack.c.bf16 %v768, %v766
        %v803 = vpack.c.bf16 %v772, %v770
        %804 = vmatprep.subr.bf16.mxu0 0
        %805 = vmatpush1.bf16.msra.mxu0 %v796
        %806 = vmatprep.subr.bf16.mxu0 0
        %807 = vmatpush1.bf16.msra.mxu0 %v797
        %808 = vmatprep.subr.bf16.mxu0 0
        %809 = vmatpush1.bf16.msra.mxu0 %v798
        %810 = vmatprep.subr.bf16.mxu0 0
        %811 = vmatpush1.bf16.msra.mxu0 %v799
        %812 = vmatprep.subr.bf16.mxu0 0
        %813 = vmatpush1.bf16.msra.mxu0 %v800
        %814 = vmatprep.subr.bf16.mxu0 0
        %815 = vmatpush1.bf16.msra.mxu0 %v801
        %816 = vmatprep.subr.bf16.mxu0 0
        %817 = vmatpush1.bf16.msra.mxu0 %v802
        %818 = vmatprep.subr.bf16.mxu0 0
        %819 = vmatpush1.bf16.msra.mxu0 %v803
        %820 = vmatprep.subr.bf16.mxu0 0
        %821 = vmatpush1.bf16.msra.mxu0 0
        %822 = vmatprep.subr.bf16.mxu0 0
        %823 = vmatpush1.bf16.msra.mxu0 0
        %824 = vmatprep.subr.bf16.mxu0 0
        %825 = vmatpush1.bf16.msra.mxu0 0
        %826 = vmatprep.subr.bf16.mxu0 0
        %827 = vmatpush1.bf16.msra.mxu0 0
        %828 = vmatprep.subr.bf16.mxu0 0
        %829 = vmatpush1.bf16.msra.mxu0 0
        %830 = vmatprep.subr.bf16.mxu0 0
        %831 = vmatpush1.bf16.msra.mxu0 0
        %832 = vmatprep.subr.bf16.mxu0 0
        %833 = vmatpush1.bf16.msra.mxu0 0
        %834 = vmatprep.subr.bf16.mxu0 0
        %835 = vmatpush1.bf16.msra.mxu0 0
        %836 = vmatprep.mubr.bf16.mxu0 0
        %837 = vmatmul.mubr.bf16.gmra.mrb[0].mxu0 %v795
        %v838 = vpop.f32.mrb[0].mxu0
        %v839 = vadd.f32 0.0, %v838
        %v840 = vpop.f32.mrb[0].mxu0
        %v841 = vpop.f32.mrb[0].mxu0
        %v842 = vadd.f32 0.0, %v841
        %v843 = vpop.f32.mrb[0].mxu0
        %844 = vdwg.mxu0
        %v845 = vmul.f32 %v839, %v794
        %v846 = vmul.f32 %v842, %v794
        %847 = vxpose.xlu0.b32.start [1/16] %v425, 128
        %848 = vxpose.xlu0.b32.cont [2/16] 0.0, 128
        %849 = vxpose.xlu0.b32.cont [3/16] 0.0, 128
        %850 = vxpose.xlu0.b32.cont [4/16] 0.0, 128
        %851 = vxpose.xlu0.b32.cont [5/16] 0.0, 128
        %852 = vxpose.xlu0.b32.cont [6/16] 0.0, 128
        %853 = vxpose.xlu0.b32.cont [7/16] 0.0, 128
        %854 = vxpose.xlu0.b32.cont [8/16] 0.0, 128
        %855 = vxpose.xlu0.b32.cont [9/16] 0.0, 128
        %856 = vxpose.xlu0.b32.cont [10/16] 0.0, 128
        %857 = vxpose.xlu0.b32.cont [11/16] 0.0, 128
        %858 = vxpose.xlu0.b32.cont [12/16] 0.0, 128
        %859 = vxpose.xlu0.b32.cont [13/16] 0.0, 128
        %860 = vxpose.xlu0.b32.cont [14/16] 0.0, 128
        %861 = vxpose.xlu0.b32.cont [15/16] 0.0, 128
        %862 = vxpose.xlu0.b32.end [16/16] 0.0, 128
        %v863 = vpop.trf.xlu0
        %v864 = vpop.trf.xlu0
        %v865 = vpop.trf.xlu0
        %v866 = vpop.trf.xlu0
        %v867 = vpop.trf.xlu0
        %v868 = vpop.trf.xlu0
        %v869 = vpop.trf.xlu0
        %v870 = vpop.trf.xlu0
        %v871 = vpop.trf.xlu0
        %v872 = vpop.trf.xlu0
        %v873 = vpop.trf.xlu0
        %v874 = vpop.trf.xlu0
        %v875 = vpop.trf.xlu0
        %v876 = vpop.trf.xlu0
        %v877 = vpop.trf.xlu0
        %v878 = vpop.trf.xlu0
        %v880 = vsel %vm510, %v863, 0
        %v883 = vsel %vm510, %v864, 0
        %v886 = vsel %vm510, %v865, 0
        %v889 = vsel %vm510, %v866, 0
        %v892 = vsel %vm510, %v867, 0
        %v895 = vsel %vm510, %v868, 0
        %v898 = vsel %vm510, %v869, 0
        %v901 = vsel %vm510, %v870, 0
        %v904 = vsel %vm510, %v871, 0
        %v907 = vsel %vm510, %v872, 0
        %v910 = vsel %vm510, %v873, 0
        %v913 = vsel %vm510, %v874, 0
        %v916 = vsel %vm510, %v875, 0
        %v919 = vsel %vm510, %v876, 0
        %v922 = vsel %vm510, %v877, 0
        %v925 = vsel %vm510, %v878, 0
        %927 = vmatprep.subr.mxu0 0.0
        %928 = vmatpush1.msra.mxu0 %v405
        %929 = vmatprep.subr.mxu0 0.0
        %930 = vmatpush1.msra.mxu0 0.0
        %931 = vmatprep.subr.mxu0 0.0
        %932 = vmatpush1.msra.mxu0 0.0
        %933 = vmatprep.subr.mxu0 0.0
        %934 = vmatpush1.msra.mxu0 0.0
        %935 = vmatprep.subr.mxu0 0.0
        %936 = vmatpush1.msra.mxu0 0.0
        %937 = vmatprep.subr.mxu0 0.0
        %938 = vmatpush1.msra.mxu0 0.0
        %939 = vmatprep.subr.mxu0 0.0
        %940 = vmatpush1.msra.mxu0 0.0
        %941 = vmatprep.subr.mxu0 0.0
        %942 = vmatpush1.msra.mxu0 0.0
        %943 = vmatprep.subr.mxu0 0.0
        %944 = vmatpush1.msra.mxu0 0.0
        %945 = vmatprep.subr.mxu0 0.0
        %946 = vmatpush1.msra.mxu0 0.0
        %947 = vmatprep.subr.mxu0 0.0
        %948 = vmatpush1.msra.mxu0 0.0
        %949 = vmatprep.subr.mxu0 0.0
        %950 = vmatpush1.msra.mxu0 0.0
        %951 = vmatprep.subr.mxu0 0.0
        %952 = vmatpush1.msra.mxu0 0.0
        %953 = vmatprep.subr.mxu0 0.0
        %954 = vmatpush1.msra.mxu0 0.0
        %955 = vmatprep.subr.mxu0 0.0
        %956 = vmatpush1.msra.mxu0 0.0
        %957 = vmatprep.subr.mxu0 0.0
        %958 = vmatpush1.msra.mxu0 0.0
        %959 = vmatprep.subr.mxu0 0.0
        %960 = vmatpush1.msra.mxu0 0.0
        %961 = vmatprep.subr.mxu0 0.0
        %962 = vmatpush1.msra.mxu0 0.0
        %963 = vmatprep.subr.mxu0 0.0
        %964 = vmatpush1.msra.mxu0 0.0
        %965 = vmatprep.subr.mxu0 0.0
        %966 = vmatpush1.msra.mxu0 0.0
        %967 = vmatprep.subr.mxu0 0.0
        %968 = vmatpush1.msra.mxu0 0.0
        %969 = vmatprep.subr.mxu0 0.0
        %970 = vmatpush1.msra.mxu0 0.0
        %971 = vmatprep.subr.mxu0 0.0
        %972 = vmatpush1.msra.mxu0 0.0
        %973 = vmatprep.subr.mxu0 0.0
        %974 = vmatpush1.msra.mxu0 0.0
        %975 = vmatprep.subr.mxu0 0.0
        %976 = vmatpush1.msra.mxu0 0.0
        %977 = vmatprep.subr.mxu0 0.0
        %978 = vmatpush1.msra.mxu0 0.0
        %979 = vmatprep.subr.mxu0 0.0
        %980 = vmatpush1.msra.mxu0 0.0
        %981 = vmatprep.subr.mxu0 0.0
        %982 = vmatpush1.msra.mxu0 0.0
        %983 = vmatprep.subr.mxu0 0.0
        %984 = vmatpush1.msra.mxu0 0.0
        %985 = vmatprep.subr.mxu0 0.0
        %986 = vmatpush1.msra.mxu0 0.0
        %987 = vmatprep.subr.mxu0 0.0
        %988 = vmatpush1.msra.mxu0 0.0
        %989 = vmatprep.subr.mxu0 0.0
        %990 = vmatpush1.msra.mxu0 0.0
        %991 = vmatprep.mubr.f32.mxu0 0.0
        %992 = vmatmul.mubr.f32.gmra.mrb[0].mxu0 %v880
        %v993 = vpop.f32.mrb[0].mxu0
        %v994 = vadd.f32 0.0, %v993
        %v995 = vpop.f32.mrb[0].mxu0
        %996 = vmatprep.mubr.f32.mxu0 0.0
        %997 = vmatmul.mubr.f32.gmra.mrb[0].mxu0 %v883
        %v998 = vpop.f32.mrb[0].mxu0
        %v999 = vadd.f32 0.0, %v998
        %v1000 = vpop.f32.mrb[0].mxu0
        %1001 = vmatprep.mubr.f32.mxu0 0.0
        %1002 = vmatmul.mubr.f32.gmra.mrb[0].mxu0 %v886
        %v1003 = vpop.f32.mrb[0].mxu0
        %v1004 = vadd.f32 0.0, %v1003
        %v1005 = vpop.f32.mrb[0].mxu0
        %1006 = vmatprep.mubr.f32.mxu0 0.0
        %1007 = vmatmul.mubr.f32.gmra.mrb[0].mxu0 %v889
        %v1008 = vpop.f32.mrb[0].mxu0
        %v1009 = vadd.f32 0.0, %v1008
        %v1010 = vpop.f32.mrb[0].mxu0
        %1011 = vmatprep.mubr.f32.mxu0 0.0
        %1012 = vmatmul.mubr.f32.gmra.mrb[0].mxu0 %v892
        %v1013 = vpop.f32.mrb[0].mxu0
        %v1014 = vadd.f32 0.0, %v1013
        %v1015 = vpop.f32.mrb[0].mxu0
        %1016 = vmatprep.mubr.f32.mxu0 0.0
        %1017 = vmatmul.mubr.f32.gmra.mrb[0].mxu0 %v895
        %v1018 = vpop.f32.mrb[0].mxu0
        %v1019 = vadd.f32 0.0, %v1018
        %v1020 = vpop.f32.mrb[0].mxu0
        %1021 = vmatprep.mubr.f32.mxu0 0.0
        %1022 = vmatmul.mubr.f32.gmra.mrb[0].mxu0 %v898
        %v1023 = vpop.f32.mrb[0].mxu0
        %v1024 = vadd.f32 0.0, %v1023
        %v1025 = vpop.f32.mrb[0].mxu0
        %1026 = vmatprep.mubr.f32.mxu0 0.0
        %1027 = vmatmul.mubr.f32.gmra.mrb[0].mxu0 %v901
        %v1028 = vpop.f32.mrb[0].mxu0
        %v1029 = vadd.f32 0.0, %v1028
        %v1030 = vpop.f32.mrb[0].mxu0
        %1031 = vmatprep.mubr.f32.mxu0 0.0
        %1032 = vmatmul.mubr.f32.gmra.mrb[0].mxu0 %v904
        %v1033 = vpop.f32.mrb[0].mxu0
        %v1034 = vadd.f32 0.0, %v1033
        %v1035 = vpop.f32.mrb[0].mxu0
        %1036 = vmatprep.mubr.f32.mxu0 0.0
        %1037 = vmatmul.mubr.f32.gmra.mrb[0].mxu0 %v907
        %v1038 = vpop.f32.mrb[0].mxu0
        %v1039 = vadd.f32 0.0, %v1038
        %v1040 = vpop.f32.mrb[0].mxu0
        %1041 = vmatprep.mubr.f32.mxu0 0.0
        %1042 = vmatmul.mubr.f32.gmra.mrb[0].mxu0 %v910
        %v1043 = vpop.f32.mrb[0].mxu0
        %v1044 = vadd.f32 0.0, %v1043
        %v1045 = vpop.f32.mrb[0].mxu0
        %1046 = vmatprep.mubr.f32.mxu0 0.0
        %1047 = vmatmul.mubr.f32.gmra.mrb[0].mxu0 %v913
        %v1048 = vpop.f32.mrb[0].mxu0
        %v1049 = vadd.f32 0.0, %v1048
        %v1050 = vpop.f32.mrb[0].mxu0
        %1051 = vmatprep.mubr.f32.mxu0 0.0
        %1052 = vmatmul.mubr.f32.gmra.mrb[0].mxu0 %v916
        %v1053 = vpop.f32.mrb[0].mxu0
        %v1054 = vadd.f32 0.0, %v1053
        %v1055 = vpop.f32.mrb[0].mxu0
        %1056 = vmatprep.mubr.f32.mxu0 0.0
        %1057 = vmatmul.mubr.f32.gmra.mrb[0].mxu0 %v919
        %v1058 = vpop.f32.mrb[0].mxu0
        %v1059 = vadd.f32 0.0, %v1058
        %v1060 = vpop.f32.mrb[0].mxu0
        %1061 = vmatprep.mubr.f32.mxu0 0.0
        %1062 = vmatmul.mubr.f32.gmra.mrb[0].mxu0 %v922
        %v1063 = vpop.f32.mrb[0].mxu0
        %v1064 = vadd.f32 0.0, %v1063
        %v1065 = vpop.f32.mrb[0].mxu0
        %1066 = vmatprep.mubr.f32.mxu0 0.0
        %1067 = vmatmul.mubr.f32.gmra.mrb[0].mxu0 %v925
        %v1068 = vpop.f32.mrb[0].mxu0
        %v1069 = vadd.f32 0.0, %v1068
        %v1070 = vpop.f32.mrb[0].mxu0
        %1071 = vdwg.mxu0
        %v1072 = vmax.f32 %v994, %v1014
        %v1073 = vmax.f32 %v999, %v1019
        %v1074 = vmax.f32 %v1004, %v1024
        %v1075 = vmax.f32 %v1009, %v1029
        %v1076 = vmax.f32 %v1072, %v1034
        %v1077 = vmax.f32 %v1073, %v1039
        %v1078 = vmax.f32 %v1074, %v1044
        %v1079 = vmax.f32 %v1075, %v1049
        %v1080 = vmax.f32 %v1076, %v1054
        %v1081 = vmax.f32 %v1077, %v1059
        %v1082 = vmax.f32 %v1078, %v1064
        %v1083 = vmax.f32 %v1079, %v1069
        %v1084 = vmax.f32 %v1080, %v1081
        %v1085 = vmax.f32 %v1082, %v1083
        %v1086 = vmax.f32 %v1084, %v1085
        %v1087 = vrot.slane %v1086, 4
        %v1088 = vmax.f32 %v1086, %v1087
        %v1089 = vrot.slane %v1088, 2
        %v1090 = vmax.f32 %v1088, %v1089
        %v1091 = vrot.slane %v1090, 1
        %v1092 = vmax.f32 %v1090, %v1091
        %v1093 = vsub.f32 %v994, %v1092
        %v1094 = vsub.f32 %v999, %v1092
        %v1095 = vsub.f32 %v1004, %v1092
        %v1096 = vsub.f32 %v1009, %v1092
        %v1097 = vsub.f32 %v1014, %v1092
        %v1098 = vsub.f32 %v1019, %v1092
        %v1099 = vsub.f32 %v1024, %v1092
        %v1100 = vsub.f32 %v1029, %v1092
        %v1101 = vsub.f32 %v1034, %v1092
        %v1102 = vsub.f32 %v1039, %v1092
        %v1103 = vsub.f32 %v1044, %v1092
        %v1104 = vsub.f32 %v1049, %v1092
        %v1105 = vsub.f32 %v1054, %v1092
        %v1106 = vsub.f32 %v1059, %v1092
        %v1107 = vsub.f32 %v1064, %v1092
        %v1108 = vsub.f32 %v1069, %v1092
        %v1109 = vmul.f32 %v1093, 1.442695
        %v1110 = vpow.pop %v1109
        %v1111 = vmul.f32 %v1094, 1.442695
        %v1112 = vpow.pop %v1111
        %v1113 = vmul.f32 %v1095, 1.442695
        %v1114 = vpow.pop %v1113
        %v1115 = vmul.f32 %v1096, 1.442695
        %v1116 = vpow.pop %v1115
        %v1117 = vmul.f32 %v1097, 1.442695
        %v1118 = vpow.pop %v1117
        %v1119 = vmul.f32 %v1098, 1.442695
        %v1120 = vpow.pop %v1119
        %v1121 = vmul.f32 %v1099, 1.442695
        %v1122 = vpow.pop %v1121
        %v1123 = vmul.f32 %v1100, 1.442695
        %v1124 = vpow.pop %v1123
        %v1125 = vmul.f32 %v1101, 1.442695
        %v1126 = vpow.pop %v1125
        %v1127 = vmul.f32 %v1102, 1.442695
        %v1128 = vpow.pop %v1127
        %v1129 = vmul.f32 %v1103, 1.442695
        %v1130 = vpow.pop %v1129
        %v1131 = vmul.f32 %v1104, 1.442695
        %v1132 = vpow.pop %v1131
        %v1133 = vmul.f32 %v1105, 1.442695
        %v1134 = vpow.pop %v1133
        %v1135 = vmul.f32 %v1106, 1.442695
        %v1136 = vpow.pop %v1135
        %v1137 = vmul.f32 %v1107, 1.442695
        %v1138 = vpow.pop %v1137
        %v1139 = vmul.f32 %v1108, 1.442695
        %v1140 = vpow.pop %v1139
        %v1141 = vadd.f32 %v1110, %v1112
        %v1142 = vadd.f32 %v1141, %v1114
        %v1143 = vadd.f32 %v1142, %v1116
        %v1144 = vadd.f32 %v1143, %v1118
        %v1145 = vadd.f32 %v1144, %v1120
        %v1146 = vadd.f32 %v1145, %v1122
        %v1147 = vadd.f32 %v1146, %v1124
        %v1148 = vadd.f32 %v1147, %v1126
        %v1149 = vadd.f32 %v1148, %v1128
        %v1150 = vadd.f32 %v1149, %v1130
        %v1151 = vadd.f32 %v1150, %v1132
        %v1152 = vadd.f32 %v1151, %v1134
        %v1153 = vadd.f32 %v1152, %v1136
        %v1154 = vadd.f32 %v1153, %v1138
        %v1155 = vadd.f32 %v1154, %v1140
        %v1156 = vrot.slane %v1155, 4
        %v1157 = vadd.f32 %v1155, %v1156
        %v1158 = vrot.slane %v1157, 2
        %v1159 = vadd.f32 %v1157, %v1158
        %v1160 = vrot.slane %v1159, 1
        %v1161 = vadd.f32 %v1159, %v1160
        %v1162 = vrcp.pop %v1161
        %v1163 = vpack.c.bf16 %v455, %v450
        %v1164 = vpack.c.bf16 %v1112, %v1110
        %v1165 = vpack.c.bf16 %v1116, %v1114
        %v1166 = vpack.c.bf16 %v1120, %v1118
        %v1167 = vpack.c.bf16 %v1124, %v1122
        %v1168 = vpack.c.bf16 %v1128, %v1126
        %v1169 = vpack.c.bf16 %v1132, %v1130
        %v1170 = vpack.c.bf16 %v1136, %v1134
        %v1171 = vpack.c.bf16 %v1140, %v1138
        %1172 = vmatprep.subr.bf16.mxu0 0
        %1173 = vmatpush1.bf16.msra.mxu0 %v1164
        %1174 = vmatprep.subr.bf16.mxu0 0
        %1175 = vmatpush1.bf16.msra.mxu0 %v1165
        %1176 = vmatprep.subr.bf16.mxu0 0
        %1177 = vmatpush1.bf16.msra.mxu0 %v1166
        %1178 = vmatprep.subr.bf16.mxu0 0
        %1179 = vmatpush1.bf16.msra.mxu0 %v1167
        %1180 = vmatprep.subr.bf16.mxu0 0
        %1181 = vmatpush1.bf16.msra.mxu0 %v1168
        %1182 = vmatprep.subr.bf16.mxu0 0
        %1183 = vmatpush1.bf16.msra.mxu0 %v1169
        %1184 = vmatprep.subr.bf16.mxu0 0
        %1185 = vmatpush1.bf16.msra.mxu0 %v1170
        %1186 = vmatprep.subr.bf16.mxu0 0
        %1187 = vmatpush1.bf16.msra.mxu0 %v1171
        %1188 = vmatprep.subr.bf16.mxu0 0
        %1189 = vmatpush1.bf16.msra.mxu0 0
        %1190 = vmatprep.subr.bf16.mxu0 0
        %1191 = vmatpush1.bf16.msra.mxu0 0
        %1192 = vmatprep.subr.bf16.mxu0 0
        %1193 = vmatpush1.bf16.msra.mxu0 0
        %1194 = vmatprep.subr.bf16.mxu0 0
        %1195 = vmatpush1.bf16.msra.mxu0 0
        %1196 = vmatprep.subr.bf16.mxu0 0
        %1197 = vmatpush1.bf16.msra.mxu0 0
        %1198 = vmatprep.subr.bf16.mxu0 0
        %1199 = vmatpush1.bf16.msra.mxu0 0
        %1200 = vmatprep.subr.bf16.mxu0 0
        %1201 = vmatpush1.bf16.msra.mxu0 0
        %1202 = vmatprep.subr.bf16.mxu0 0
        %1203 = vmatpush1.bf16.msra.mxu0 0
        %1204 = vmatprep.mubr.bf16.mxu0 0
        %1205 = vmatmul.mubr.bf16.gmra.mrb[0].mxu0 %v1163
        %v1206 = vpop.f32.mrb[0].mxu0
        %v1207 = vadd.f32 0.0, %v1206
        %v1208 = vpop.f32.mrb[0].mxu0
        %v1209 = vpop.f32.mrb[0].mxu0
        %v1210 = vadd.f32 0.0, %v1209
        %v1211 = vpop.f32.mrb[0].mxu0
        %1212 = vdwg.mxu0
        %v1213 = vmul.f32 %v1207, %v1162
        %v1214 = vmul.f32 %v1210, %v1162
        %1215 = vxpose.xlu0.b32.start [1/16] %v430, 128
        %1216 = vxpose.xlu0.b32.cont [2/16] 0.0, 128
        %1217 = vxpose.xlu0.b32.cont [3/16] 0.0, 128
        %1218 = vxpose.xlu0.b32.cont [4/16] 0.0, 128
        %1219 = vxpose.xlu0.b32.cont [5/16] 0.0, 128
        %1220 = vxpose.xlu0.b32.cont [6/16] 0.0, 128
        %1221 = vxpose.xlu0.b32.cont [7/16] 0.0, 128
        %1222 = vxpose.xlu0.b32.cont [8/16] 0.0, 128
        %1223 = vxpose.xlu0.b32.cont [9/16] 0.0, 128
        %1224 = vxpose.xlu0.b32.cont [10/16] 0.0, 128
        %1225 = vxpose.xlu0.b32.cont [11/16] 0.0, 128
        %1226 = vxpose.xlu0.b32.cont [12/16] 0.0, 128
        %1227 = vxpose.xlu0.b32.cont [13/16] 0.0, 128
        %1228 = vxpose.xlu0.b32.cont [14/16] 0.0, 128
        %1229 = vxpose.xlu0.b32.cont [15/16] 0.0, 128
        %1230 = vxpose.xlu0.b32.end [16/16] 0.0, 128
        %v1231 = vpop.trf.xlu0
        %v1232 = vpop.trf.xlu0
        %v1233 = vpop.trf.xlu0
        %v1234 = vpop.trf.xlu0
        %v1235 = vpop.trf.xlu0
        %v1236 = vpop.trf.xlu0
        %v1237 = vpop.trf.xlu0
        %v1238 = vpop.trf.xlu0
        %v1239 = vpop.trf.xlu0
        %v1240 = vpop.trf.xlu0
        %v1241 = vpop.trf.xlu0
        %v1242 = vpop.trf.xlu0
        %v1243 = vpop.trf.xlu0
        %v1244 = vpop.trf.xlu0
        %v1245 = vpop.trf.xlu0
        %v1246 = vpop.trf.xlu0
        %v1248 = vsel %vm510, %v1231, 0
        %v1251 = vsel %vm510, %v1232, 0
        %v1254 = vsel %vm510, %v1233, 0
        %v1257 = vsel %vm510, %v1234, 0
        %v1260 = vsel %vm510, %v1235, 0
        %v1263 = vsel %vm510, %v1236, 0
        %v1266 = vsel %vm510, %v1237, 0
        %v1269 = vsel %vm510, %v1238, 0
        %v1272 = vsel %vm510, %v1239, 0
        %v1275 = vsel %vm510, %v1240, 0
        %v1278 = vsel %vm510, %v1241, 0
        %v1281 = vsel %vm510, %v1242, 0
        %v1284 = vsel %vm510, %v1243, 0
        %v1287 = vsel %vm510, %v1244, 0
        %v1290 = vsel %vm510, %v1245, 0
        %v1293 = vsel %vm510, %v1246, 0
        %1295 = vmatprep.subr.mxu0 0.0
        %1296 = vmatpush1.msra.mxu0 %v410
        %1297 = vmatprep.subr.mxu0 0.0
        %1298 = vmatpush1.msra.mxu0 0.0
        %1299 = vmatprep.subr.mxu0 0.0
        %1300 = vmatpush1.msra.mxu0 0.0
        %1301 = vmatprep.subr.mxu0 0.0
        %1302 = vmatpush1.msra.mxu0 0.0
        %1303 = vmatprep.subr.mxu0 0.0
        %1304 = vmatpush1.msra.mxu0 0.0
        %1305 = vmatprep.subr.mxu0 0.0
        %1306 = vmatpush1.msra.mxu0 0.0
        %1307 = vmatprep.subr.mxu0 0.0
        %1308 = vmatpush1.msra.mxu0 0.0
        %1309 = vmatprep.subr.mxu0 0.0
        %1310 = vmatpush1.msra.mxu0 0.0
        %1311 = vmatprep.subr.mxu0 0.0
        %1312 = vmatpush1.msra.mxu0 0.0
        %1313 = vmatprep.subr.mxu0 0.0
        %1314 = vmatpush1.msra.mxu0 0.0
        %1315 = vmatprep.subr.mxu0 0.0
        %1316 = vmatpush1.msra.mxu0 0.0
        %1317 = vmatprep.subr.mxu0 0.0
        %1318 = vmatpush1.msra.mxu0 0.0
        %1319 = vmatprep.subr.mxu0 0.0
        %1320 = vmatpush1.msra.mxu0 0.0
        %1321 = vmatprep.subr.mxu0 0.0
        %1322 = vmatpush1.msra.mxu0 0.0
        %1323 = vmatprep.subr.mxu0 0.0
        %1324 = vmatpush1.msra.mxu0 0.0
        %1325 = vmatprep.subr.mxu0 0.0
        %1326 = vmatpush1.msra.mxu0 0.0
        %1327 = vmatprep.subr.mxu0 0.0
        %1328 = vmatpush1.msra.mxu0 0.0
        %1329 = vmatprep.subr.mxu0 0.0
        %1330 = vmatpush1.msra.mxu0 0.0
        %1331 = vmatprep.subr.mxu0 0.0
        %1332 = vmatpush1.msra.mxu0 0.0
        %1333 = vmatprep.subr.mxu0 0.0
        %1334 = vmatpush1.msra.mxu0 0.0
        %1335 = vmatprep.subr.mxu0 0.0
        %1336 = vmatpush1.msra.mxu0 0.0
        %1337 = vmatprep.subr.mxu0 0.0
        %1338 = vmatpush1.msra.mxu0 0.0
        %1339 = vmatprep.subr.mxu0 0.0
        %1340 = vmatpush1.msra.mxu0 0.0
        %1341 = vmatprep.subr.mxu0 0.0
        %1342 = vmatpush1.msra.mxu0 0.0
        %1343 = vmatprep.subr.mxu0 0.0
        %1344 = vmatpush1.msra.mxu0 0.0
        %1345 = vmatprep.subr.mxu0 0.0
        %1346 = vmatpush1.msra.mxu0 0.0
        %1347 = vmatprep.subr.mxu0 0.0
        %1348 = vmatpush1.msra.mxu0 0.0
        %1349 = vmatprep.subr.mxu0 0.0
        %1350 = vmatpush1.msra.mxu0 0.0
        %1351 = vmatprep.subr.mxu0 0.0
        %1352 = vmatpush1.msra.mxu0 0.0
        %1353 = vmatprep.subr.mxu0 0.0
        %1354 = vmatpush1.msra.mxu0 0.0
        %1355 = vmatprep.subr.mxu0 0.0
        %1356 = vmatpush1.msra.mxu0 0.0
        %1357 = vmatprep.subr.mxu0 0.0
        %1358 = vmatpush1.msra.mxu0 0.0
        %1359 = vmatprep.mubr.f32.mxu0 0.0
        %1360 = vmatmul.mubr.f32.gmra.mrb[0].mxu0 %v1248
        %v1361 = vpop.f32.mrb[0].mxu0
        %v1362 = vadd.f32 0.0, %v1361
        %v1363 = vpop.f32.mrb[0].mxu0
        %1364 = vmatprep.mubr.f32.mxu0 0.0
        %1365 = vmatmul.mubr.f32.gmra.mrb[0].mxu0 %v1251
        %v1366 = vpop.f32.mrb[0].mxu0
        %v1367 = vadd.f32 0.0, %v1366
        %v1368 = vpop.f32.mrb[0].mxu0
        %1369 = vmatprep.mubr.f32.mxu0 0.0
        %1370 = vmatmul.mubr.f32.gmra.mrb[0].mxu0 %v1254
        %v1371 = vpop.f32.mrb[0].mxu0
        %v1372 = vadd.f32 0.0, %v1371
        %v1373 = vpop.f32.mrb[0].mxu0
        %1374 = vmatprep.mubr.f32.mxu0 0.0
        %1375 = vmatmul.mubr.f32.gmra.mrb[0].mxu0 %v1257
        %v1376 = vpop.f32.mrb[0].mxu0
        %v1377 = vadd.f32 0.0, %v1376
        %v1378 = vpop.f32.mrb[0].mxu0
        %1379 = vmatprep.mubr.f32.mxu0 0.0
        %1380 = vmatmul.mubr.f32.gmra.mrb[0].mxu0 %v1260
        %v1381 = vpop.f32.mrb[0].mxu0
        %v1382 = vadd.f32 0.0, %v1381
        %v1383 = vpop.f32.mrb[0].mxu0
        %1384 = vmatprep.mubr.f32.mxu0 0.0
        %1385 = vmatmul.mubr.f32.gmra.mrb[0].mxu0 %v1263
        %v1386 = vpop.f32.mrb[0].mxu0
        %v1387 = vadd.f32 0.0, %v1386
        %v1388 = vpop.f32.mrb[0].mxu0
        %1389 = vmatprep.mubr.f32.mxu0 0.0
        %1390 = vmatmul.mubr.f32.gmra.mrb[0].mxu0 %v1266
        %v1391 = vpop.f32.mrb[0].mxu0
        %v1392 = vadd.f32 0.0, %v1391
        %v1393 = vpop.f32.mrb[0].mxu0
        %1394 = vmatprep.mubr.f32.mxu0 0.0
        %1395 = vmatmul.mubr.f32.gmra.mrb[0].mxu0 %v1269
        %v1396 = vpop.f32.mrb[0].mxu0
        %v1397 = vadd.f32 0.0, %v1396
        %v1398 = vpop.f32.mrb[0].mxu0
        %1399 = vmatprep.mubr.f32.mxu0 0.0
        %1400 = vmatmul.mubr.f32.gmra.mrb[0].mxu0 %v1272
        %v1401 = vpop.f32.mrb[0].mxu0
        %v1402 = vadd.f32 0.0, %v1401
        %v1403 = vpop.f32.mrb[0].mxu0
        %1404 = vmatprep.mubr.f32.mxu0 0.0
        %1405 = vmatmul.mubr.f32.gmra.mrb[0].mxu0 %v1275
        %v1406 = vpop.f32.mrb[0].mxu0
        %v1407 = vadd.f32 0.0, %v1406
        %v1408 = vpop.f32.mrb[0].mxu0
        %1409 = vmatprep.mubr.f32.mxu0 0.0
        %1410 = vmatmul.mubr.f32.gmra.mrb[0].mxu0 %v1278
        %v1411 = vpop.f32.mrb[0].mxu0
        %v1412 = vadd.f32 0.0, %v1411
        %v1413 = vpop.f32.mrb[0].mxu0
        %1414 = vmatprep.mubr.f32.mxu0 0.0
        %1415 = vmatmul.mubr.f32.gmra.mrb[0].mxu0 %v1281
        %v1416 = vpop.f32.mrb[0].mxu0
        %v1417 = vadd.f32 0.0, %v1416
        %v1418 = vpop.f32.mrb[0].mxu0
        %1419 = vmatprep.mubr.f32.mxu0 0.0
        %1420 = vmatmul.mubr.f32.gmra.mrb[0].mxu0 %v1284
        %v1421 = vpop.f32.mrb[0].mxu0
        %v1422 = vadd.f32 0.0, %v1421
        %v1423 = vpop.f32.mrb[0].mxu0
        %1424 = vmatprep.mubr.f32.mxu0 0.0
        %1425 = vmatmul.mubr.f32.gmra.mrb[0].mxu0 %v1287
        %v1426 = vpop.f32.mrb[0].mxu0
        %v1427 = vadd.f32 0.0, %v1426
        %v1428 = vpop.f32.mrb[0].mxu0
        %1429 = vmatprep.mubr.f32.mxu0 0.0
        %1430 = vmatmul.mubr.f32.gmra.mrb[0].mxu0 %v1290
        %v1431 = vpop.f32.mrb[0].mxu0
        %v1432 = vadd.f32 0.0, %v1431
        %v1433 = vpop.f32.mrb[0].mxu0
        %1434 = vmatprep.mubr.f32.mxu0 0.0
        %1435 = vmatmul.mubr.f32.gmra.mrb[0].mxu0 %v1293
        %v1436 = vpop.f32.mrb[0].mxu0
        %v1437 = vadd.f32 0.0, %v1436
        %v1438 = vpop.f32.mrb[0].mxu0
        %1439 = vdwg.mxu0
        %v1440 = vmax.f32 %v1362, %v1382
        %v1441 = vmax.f32 %v1367, %v1387
        %v1442 = vmax.f32 %v1372, %v1392
        %v1443 = vmax.f32 %v1377, %v1397
        %v1444 = vmax.f32 %v1440, %v1402
        %v1445 = vmax.f32 %v1441, %v1407
        %v1446 = vmax.f32 %v1442, %v1412
        %v1447 = vmax.f32 %v1443, %v1417
        %v1448 = vmax.f32 %v1444, %v1422
        %v1449 = vmax.f32 %v1445, %v1427
        %v1450 = vmax.f32 %v1446, %v1432
        %v1451 = vmax.f32 %v1447, %v1437
        %v1452 = vmax.f32 %v1448, %v1449
        %v1453 = vmax.f32 %v1450, %v1451
        %v1454 = vmax.f32 %v1452, %v1453
        %v1455 = vrot.slane %v1454, 4
        %v1456 = vmax.f32 %v1454, %v1455
        %v1457 = vrot.slane %v1456, 2
        %v1458 = vmax.f32 %v1456, %v1457
        %v1459 = vrot.slane %v1458, 1
        %v1460 = vmax.f32 %v1458, %v1459
        %v1461 = vsub.f32 %v1362, %v1460
        %v1462 = vsub.f32 %v1367, %v1460
        %v1463 = vsub.f32 %v1372, %v1460
        %v1464 = vsub.f32 %v1377, %v1460
        %v1465 = vsub.f32 %v1382, %v1460
        %v1466 = vsub.f32 %v1387, %v1460
        %v1467 = vsub.f32 %v1392, %v1460
        %v1468 = vsub.f32 %v1397, %v1460
        %v1469 = vsub.f32 %v1402, %v1460
        %v1470 = vsub.f32 %v1407, %v1460
        %v1471 = vsub.f32 %v1412, %v1460
        %v1472 = vsub.f32 %v1417, %v1460
        %v1473 = vsub.f32 %v1422, %v1460
        %v1474 = vsub.f32 %v1427, %v1460
        %v1475 = vsub.f32 %v1432, %v1460
        %v1476 = vsub.f32 %v1437, %v1460
        %v1477 = vmul.f32 %v1461, 1.442695
        %v1478 = vpow.pop %v1477
        %v1479 = vmul.f32 %v1462, 1.442695
        %v1480 = vpow.pop %v1479
        %v1481 = vmul.f32 %v1463, 1.442695
        %v1482 = vpow.pop %v1481
        %v1483 = vmul.f32 %v1464, 1.442695
        %v1484 = vpow.pop %v1483
        %v1485 = vmul.f32 %v1465, 1.442695
        %v1486 = vpow.pop %v1485
        %v1487 = vmul.f32 %v1466, 1.442695
        %v1488 = vpow.pop %v1487
        %v1489 = vmul.f32 %v1467, 1.442695
        %v1490 = vpow.pop %v1489
        %v1491 = vmul.f32 %v1468, 1.442695
        %v1492 = vpow.pop %v1491
        %v1493 = vmul.f32 %v1469, 1.442695
        %v1494 = vpow.pop %v1493
        %v1495 = vmul.f32 %v1470, 1.442695
        %v1496 = vpow.pop %v1495
        %v1497 = vmul.f32 %v1471, 1.442695
        %v1498 = vpow.pop %v1497
        %v1499 = vmul.f32 %v1472, 1.442695
        %v1500 = vpow.pop %v1499
        %v1501 = vmul.f32 %v1473, 1.442695
        %v1502 = vpow.pop %v1501
        %v1503 = vmul.f32 %v1474, 1.442695
        %v1504 = vpow.pop %v1503
        %v1505 = vmul.f32 %v1475, 1.442695
        %v1506 = vpow.pop %v1505
        %v1507 = vmul.f32 %v1476, 1.442695
        %v1508 = vpow.pop %v1507
        %v1509 = vadd.f32 %v1478, %v1480
        %v1510 = vadd.f32 %v1509, %v1482
        %v1511 = vadd.f32 %v1510, %v1484
        %v1512 = vadd.f32 %v1511, %v1486
        %v1513 = vadd.f32 %v1512, %v1488
        %v1514 = vadd.f32 %v1513, %v1490
        %v1515 = vadd.f32 %v1514, %v1492
        %v1516 = vadd.f32 %v1515, %v1494
        %v1517 = vadd.f32 %v1516, %v1496
        %v1518 = vadd.f32 %v1517, %v1498
        %v1519 = vadd.f32 %v1518, %v1500
        %v1520 = vadd.f32 %v1519, %v1502
        %v1521 = vadd.f32 %v1520, %v1504
        %v1522 = vadd.f32 %v1521, %v1506
        %v1523 = vadd.f32 %v1522, %v1508
        %v1524 = vrot.slane %v1523, 4
        %v1525 = vadd.f32 %v1523, %v1524
        %v1526 = vrot.slane %v1525, 2
        %v1527 = vadd.f32 %v1525, %v1526
        %v1528 = vrot.slane %v1527, 1
        %v1529 = vadd.f32 %v1527, %v1528
        %v1530 = vrcp.pop %v1529
        %v1531 = vpack.c.bf16 %v465, %v460
        %v1532 = vpack.c.bf16 %v1480, %v1478
        %v1533 = vpack.c.bf16 %v1484, %v1482
        %v1534 = vpack.c.bf16 %v1488, %v1486
        %v1535 = vpack.c.bf16 %v1492, %v1490
        %v1536 = vpack.c.bf16 %v1496, %v1494
        %v1537 = vpack.c.bf16 %v1500, %v1498
        %v1538 = vpack.c.bf16 %v1504, %v1502
        %v1539 = vpack.c.bf16 %v1508, %v1506
        %1540 = vmatprep.subr.bf16.mxu0 0
        %1541 = vmatpush1.bf16.msra.mxu0 %v1532
        %1542 = vmatprep.subr.bf16.mxu0 0
        %1543 = vmatpush1.bf16.msra.mxu0 %v1533
        %1544 = vmatprep.subr.bf16.mxu0 0
        %1545 = vmatpush1.bf16.msra.mxu0 %v1534
        %1546 = vmatprep.subr.bf16.mxu0 0
        %1547 = vmatpush1.bf16.msra.mxu0 %v1535
        %1548 = vmatprep.subr.bf16.mxu0 0
        %1549 = vmatpush1.bf16.msra.mxu0 %v1536
        %1550 = vmatprep.subr.bf16.mxu0 0
        %1551 = vmatpush1.bf16.msra.mxu0 %v1537
        %1552 = vmatprep.subr.bf16.mxu0 0
        %1553 = vmatpush1.bf16.msra.mxu0 %v1538
        %1554 = vmatprep.subr.bf16.mxu0 0
        %1555 = vmatpush1.bf16.msra.mxu0 %v1539
        %1556 = vmatprep.subr.bf16.mxu0 0
        %1557 = vmatpush1.bf16.msra.mxu0 0
        %1558 = vmatprep.subr.bf16.mxu0 0
        %1559 = vmatpush1.bf16.msra.mxu0 0
        %1560 = vmatprep.subr.bf16.mxu0 0
        %1561 = vmatpush1.bf16.msra.mxu0 0
        %1562 = vmatprep.subr.bf16.mxu0 0
        %1563 = vmatpush1.bf16.msra.mxu0 0
        %1564 = vmatprep.subr.bf16.mxu0 0
        %1565 = vmatpush1.bf16.msra.mxu0 0
        %1566 = vmatprep.subr.bf16.mxu0 0
        %1567 = vmatpush1.bf16.msra.mxu0 0
        %1568 = vmatprep.subr.bf16.mxu0 0
        %1569 = vmatpush1.bf16.msra.mxu0 0
        %1570 = vmatprep.subr.bf16.mxu0 0
        %1571 = vmatpush1.bf16.msra.mxu0 0
        %1572 = vmatprep.mubr.bf16.mxu0 0
        %1573 = vmatmul.mubr.bf16.gmra.mrb[0].mxu0 %v1531
        %v1574 = vpop.f32.mrb[0].mxu0
        %v1575 = vadd.f32 0.0, %v1574
        %v1576 = vpop.f32.mrb[0].mxu0
        %v1577 = vpop.f32.mrb[0].mxu0
        %v1578 = vadd.f32 0.0, %v1577
        %v1579 = vpop.f32.mrb[0].mxu0
        %1580 = vdwg.mxu0
        %v1581 = vmul.f32 %v1575, %v1530
        %v1582 = vmul.f32 %v1578, %v1530
        %1583 = vxpose.xlu0.b32.start [1/16] %v435, 128
        %1584 = vxpose.xlu0.b32.cont [2/16] 0.0, 128
        %1585 = vxpose.xlu0.b32.cont [3/16] 0.0, 128
        %1586 = vxpose.xlu0.b32.cont [4/16] 0.0, 128
        %1587 = vxpose.xlu0.b32.cont [5/16] 0.0, 128
        %1588 = vxpose.xlu0.b32.cont [6/16] 0.0, 128
        %1589 = vxpose.xlu0.b32.cont [7/16] 0.0, 128
        %1590 = vxpose.xlu0.b32.cont [8/16] 0.0, 128
        %1591 = vxpose.xlu0.b32.cont [9/16] 0.0, 128
        %1592 = vxpose.xlu0.b32.cont [10/16] 0.0, 128
        %1593 = vxpose.xlu0.b32.cont [11/16] 0.0, 128
        %1594 = vxpose.xlu0.b32.cont [12/16] 0.0, 128
        %1595 = vxpose.xlu0.b32.cont [13/16] 0.0, 128
        %1596 = vxpose.xlu0.b32.cont [14/16] 0.0, 128
        %1597 = vxpose.xlu0.b32.cont [15/16] 0.0, 128
        %1598 = vxpose.xlu0.b32.end [16/16] 0.0, 128
        %v1599 = vpop.trf.xlu0
        %v1600 = vpop.trf.xlu0
        %v1601 = vpop.trf.xlu0
        %v1602 = vpop.trf.xlu0
        %v1603 = vpop.trf.xlu0
        %v1604 = vpop.trf.xlu0
        %v1605 = vpop.trf.xlu0
        %v1606 = vpop.trf.xlu0
        %v1607 = vpop.trf.xlu0
        %v1608 = vpop.trf.xlu0
        %v1609 = vpop.trf.xlu0
        %v1610 = vpop.trf.xlu0
        %v1611 = vpop.trf.xlu0
        %v1612 = vpop.trf.xlu0
        %v1613 = vpop.trf.xlu0
        %v1614 = vpop.trf.xlu0
        %v1616 = vsel %vm510, %v1599, 0
        %v1619 = vsel %vm510, %v1600, 0
        %v1622 = vsel %vm510, %v1601, 0
        %v1625 = vsel %vm510, %v1602, 0
        %v1628 = vsel %vm510, %v1603, 0
        %v1631 = vsel %vm510, %v1604, 0
        %v1634 = vsel %vm510, %v1605, 0
        %v1637 = vsel %vm510, %v1606, 0
        %v1640 = vsel %vm510, %v1607, 0
        %v1643 = vsel %vm510, %v1608, 0
        %v1646 = vsel %vm510, %v1609, 0
        %v1649 = vsel %vm510, %v1610, 0
        %v1652 = vsel %vm510, %v1611, 0
        %v1655 = vsel %vm510, %v1612, 0
        %v1658 = vsel %vm510, %v1613, 0
        %v1661 = vsel %vm510, %v1614, 0
        %1663 = vmatprep.subr.mxu0 0.0
        %1664 = vmatpush1.msra.mxu0 %v415
        %1665 = vmatprep.subr.mxu0 0.0
        %1666 = vmatpush1.msra.mxu0 0.0
        %1667 = vmatprep.subr.mxu0 0.0
        %1668 = vmatpush1.msra.mxu0 0.0
        %1669 = vmatprep.subr.mxu0 0.0
        %1670 = vmatpush1.msra.mxu0 0.0
        %1671 = vmatprep.subr.mxu0 0.0
        %1672 = vmatpush1.msra.mxu0 0.0
        %1673 = vmatprep.subr.mxu0 0.0
        %1674 = vmatpush1.msra.mxu0 0.0
        %1675 = vmatprep.subr.mxu0 0.0
        %1676 = vmatpush1.msra.mxu0 0.0
        %1677 = vmatprep.subr.mxu0 0.0
        %1678 = vmatpush1.msra.mxu0 0.0
        %1679 = vmatprep.subr.mxu0 0.0
        %1680 = vmatpush1.msra.mxu0 0.0
        %1681 = vmatprep.subr.mxu0 0.0
        %1682 = vmatpush1.msra.mxu0 0.0
        %1683 = vmatprep.subr.mxu0 0.0
        %1684 = vmatpush1.msra.mxu0 0.0
        %1685 = vmatprep.subr.mxu0 0.0
        %1686 = vmatpush1.msra.mxu0 0.0
        %1687 = vmatprep.subr.mxu0 0.0
        %1688 = vmatpush1.msra.mxu0 0.0
        %1689 = vmatprep.subr.mxu0 0.0
        %1690 = vmatpush1.msra.mxu0 0.0
        %1691 = vmatprep.subr.mxu0 0.0
        %1692 = vmatpush1.msra.mxu0 0.0
        %1693 = vmatprep.subr.mxu0 0.0
        %1694 = vmatpush1.msra.mxu0 0.0
        %1695 = vmatprep.subr.mxu0 0.0
        %1696 = vmatpush1.msra.mxu0 0.0
        %1697 = vmatprep.subr.mxu0 0.0
        %1698 = vmatpush1.msra.mxu0 0.0
        %1699 = vmatprep.subr.mxu0 0.0
        %1700 = vmatpush1.msra.mxu0 0.0
        %1701 = vmatprep.subr.mxu0 0.0
        %1702 = vmatpush1.msra.mxu0 0.0
        %1703 = vmatprep.subr.mxu0 0.0
        %1704 = vmatpush1.msra.mxu0 0.0
        %1705 = vmatprep.subr.mxu0 0.0
        %1706 = vmatpush1.msra.mxu0 0.0
        %1707 = vmatprep.subr.mxu0 0.0
        %1708 = vmatpush1.msra.mxu0 0.0
        %1709 = vmatprep.subr.mxu0 0.0
        %1710 = vmatpush1.msra.mxu0 0.0
        %1711 = vmatprep.subr.mxu0 0.0
        %1712 = vmatpush1.msra.mxu0 0.0
        %1713 = vmatprep.subr.mxu0 0.0
        %1714 = vmatpush1.msra.mxu0 0.0
        %1715 = vmatprep.subr.mxu0 0.0
        %1716 = vmatpush1.msra.mxu0 0.0
        %1717 = vmatprep.subr.mxu0 0.0
        %1718 = vmatpush1.msra.mxu0 0.0
        %1719 = vmatprep.subr.mxu0 0.0
        %1720 = vmatpush1.msra.mxu0 0.0
        %1721 = vmatprep.subr.mxu0 0.0
        %1722 = vmatpush1.msra.mxu0 0.0
        %1723 = vmatprep.subr.mxu0 0.0
        %1724 = vmatpush1.msra.mxu0 0.0
        %1725 = vmatprep.subr.mxu0 0.0
        %1726 = vmatpush1.msra.mxu0 0.0
        %1727 = vmatprep.mubr.f32.mxu0 0.0
        %1728 = vmatmul.mubr.f32.gmra.mrb[0].mxu0 %v1616
        %v1729 = vpop.f32.mrb[0].mxu0
        %v1730 = vadd.f32 0.0, %v1729
        %v1731 = vpop.f32.mrb[0].mxu0
        %1732 = vmatprep.mubr.f32.mxu0 0.0
        %1733 = vmatmul.mubr.f32.gmra.mrb[0].mxu0 %v1619
        %v1734 = vpop.f32.mrb[0].mxu0
        %v1735 = vadd.f32 0.0, %v1734
        %v1736 = vpop.f32.mrb[0].mxu0
        %1737 = vmatprep.mubr.f32.mxu0 0.0
        %1738 = vmatmul.mubr.f32.gmra.mrb[0].mxu0 %v1622
        %v1739 = vpop.f32.mrb[0].mxu0
        %v1740 = vadd.f32 0.0, %v1739
        %v1741 = vpop.f32.mrb[0].mxu0
        %1742 = vmatprep.mubr.f32.mxu0 0.0
        %1743 = vmatmul.mubr.f32.gmra.mrb[0].mxu0 %v1625
        %v1744 = vpop.f32.mrb[0].mxu0
        %v1745 = vadd.f32 0.0, %v1744
        %v1746 = vpop.f32.mrb[0].mxu0
        %1747 = vmatprep.mubr.f32.mxu0 0.0
        %1748 = vmatmul.mubr.f32.gmra.mrb[0].mxu0 %v1628
        %v1749 = vpop.f32.mrb[0].mxu0
        %v1750 = vadd.f32 0.0, %v1749
        %v1751 = vpop.f32.mrb[0].mxu0
        %1752 = vmatprep.mubr.f32.mxu0 0.0
        %1753 = vmatmul.mubr.f32.gmra.mrb[0].mxu0 %v1631
        %v1754 = vpop.f32.mrb[0].mxu0
        %v1755 = vadd.f32 0.0, %v1754
        %v1756 = vpop.f32.mrb[0].mxu0
        %1757 = vmatprep.mubr.f32.mxu0 0.0
        %1758 = vmatmul.mubr.f32.gmra.mrb[0].mxu0 %v1634
        %v1759 = vpop.f32.mrb[0].mxu0
        %v1760 = vadd.f32 0.0, %v1759
        %v1761 = vpop.f32.mrb[0].mxu0
        %1762 = vmatprep.mubr.f32.mxu0 0.0
        %1763 = vmatmul.mubr.f32.gmra.mrb[0].mxu0 %v1637
        %v1764 = vpop.f32.mrb[0].mxu0
        %v1765 = vadd.f32 0.0, %v1764
        %v1766 = vpop.f32.mrb[0].mxu0
        %1767 = vmatprep.mubr.f32.mxu0 0.0
        %1768 = vmatmul.mubr.f32.gmra.mrb[0].mxu0 %v1640
        %v1769 = vpop.f32.mrb[0].mxu0
        %v1770 = vadd.f32 0.0, %v1769
        %v1771 = vpop.f32.mrb[0].mxu0
        %1772 = vmatprep.mubr.f32.mxu0 0.0
        %1773 = vmatmul.mubr.f32.gmra.mrb[0].mxu0 %v1643
        %v1774 = vpop.f32.mrb[0].mxu0
        %v1775 = vadd.f32 0.0, %v1774
        %v1776 = vpop.f32.mrb[0].mxu0
        %1777 = vmatprep.mubr.f32.mxu0 0.0
        %1778 = vmatmul.mubr.f32.gmra.mrb[0].mxu0 %v1646
        %v1779 = vpop.f32.mrb[0].mxu0
        %v1780 = vadd.f32 0.0, %v1779
        %v1781 = vpop.f32.mrb[0].mxu0
        %1782 = vmatprep.mubr.f32.mxu0 0.0
        %1783 = vmatmul.mubr.f32.gmra.mrb[0].mxu0 %v1649
        %v1784 = vpop.f32.mrb[0].mxu0
        %v1785 = vadd.f32 0.0, %v1784
        %v1786 = vpop.f32.mrb[0].mxu0
        %1787 = vmatprep.mubr.f32.mxu0 0.0
        %1788 = vmatmul.mubr.f32.gmra.mrb[0].mxu0 %v1652
        %v1789 = vpop.f32.mrb[0].mxu0
        %v1790 = vadd.f32 0.0, %v1789
        %v1791 = vpop.f32.mrb[0].mxu0
        %1792 = vmatprep.mubr.f32.mxu0 0.0
        %1793 = vmatmul.mubr.f32.gmra.mrb[0].mxu0 %v1655
        %v1794 = vpop.f32.mrb[0].mxu0
        %v1795 = vadd.f32 0.0, %v1794
        %v1796 = vpop.f32.mrb[0].mxu0
        %1797 = vmatprep.mubr.f32.mxu0 0.0
        %1798 = vmatmul.mubr.f32.gmra.mrb[0].mxu0 %v1658
        %v1799 = vpop.f32.mrb[0].mxu0
        %v1800 = vadd.f32 0.0, %v1799
        %v1801 = vpop.f32.mrb[0].mxu0
        %1802 = vmatprep.mubr.f32.mxu0 0.0
        %1803 = vmatmul.mubr.f32.gmra.mrb[0].mxu0 %v1661
        %v1804 = vpop.f32.mrb[0].mxu0
        %v1805 = vadd.f32 0.0, %v1804
        %v1806 = vpop.f32.mrb[0].mxu0
        %1807 = vdwg.mxu0
        %v1808 = vmax.f32 %v1730, %v1750
        %v1809 = vmax.f32 %v1735, %v1755
        %v1810 = vmax.f32 %v1740, %v1760
        %v1811 = vmax.f32 %v1745, %v1765
        %v1812 = vmax.f32 %v1808, %v1770
        %v1813 = vmax.f32 %v1809, %v1775
        %v1814 = vmax.f32 %v1810, %v1780
        %v1815 = vmax.f32 %v1811, %v1785
        %v1816 = vmax.f32 %v1812, %v1790
        %v1817 = vmax.f32 %v1813, %v1795
        %v1818 = vmax.f32 %v1814, %v1800
        %v1819 = vmax.f32 %v1815, %v1805
        %v1820 = vmax.f32 %v1816, %v1817
        %v1821 = vmax.f32 %v1818, %v1819
        %v1822 = vmax.f32 %v1820, %v1821
        %v1823 = vrot.slane %v1822, 4
        %v1824 = vmax.f32 %v1822, %v1823
        %v1825 = vrot.slane %v1824, 2
        %v1826 = vmax.f32 %v1824, %v1825
        %v1827 = vrot.slane %v1826, 1
        %v1828 = vmax.f32 %v1826, %v1827
        %v1829 = vsub.f32 %v1730, %v1828
        %v1830 = vsub.f32 %v1735, %v1828
        %v1831 = vsub.f32 %v1740, %v1828
        %v1832 = vsub.f32 %v1745, %v1828
        %v1833 = vsub.f32 %v1750, %v1828
        %v1834 = vsub.f32 %v1755, %v1828
        %v1835 = vsub.f32 %v1760, %v1828
        %v1836 = vsub.f32 %v1765, %v1828
        %v1837 = vsub.f32 %v1770, %v1828
        %v1838 = vsub.f32 %v1775, %v1828
        %v1839 = vsub.f32 %v1780, %v1828
        %v1840 = vsub.f32 %v1785, %v1828
        %v1841 = vsub.f32 %v1790, %v1828
        %v1842 = vsub.f32 %v1795, %v1828
        %v1843 = vsub.f32 %v1800, %v1828
        %v1844 = vsub.f32 %v1805, %v1828
        %v1845 = vmul.f32 %v1829, 1.442695
        %v1846 = vpow.pop %v1845
        %v1847 = vmul.f32 %v1830, 1.442695
        %v1848 = vpow.pop %v1847
        %v1849 = vmul.f32 %v1831, 1.442695
        %v1850 = vpow.pop %v1849
        %v1851 = vmul.f32 %v1832, 1.442695
        %v1852 = vpow.pop %v1851
        %v1853 = vmul.f32 %v1833, 1.442695
        %v1854 = vpow.pop %v1853
        %v1855 = vmul.f32 %v1834, 1.442695
        %v1856 = vpow.pop %v1855
        %v1857 = vmul.f32 %v1835, 1.442695
        %v1858 = vpow.pop %v1857
        %v1859 = vmul.f32 %v1836, 1.442695
        %v1860 = vpow.pop %v1859
        %v1861 = vmul.f32 %v1837, 1.442695
        %v1862 = vpow.pop %v1861
        %v1863 = vmul.f32 %v1838, 1.442695
        %v1864 = vpow.pop %v1863
        %v1865 = vmul.f32 %v1839, 1.442695
        %v1866 = vpow.pop %v1865
        %v1867 = vmul.f32 %v1840, 1.442695
        %v1868 = vpow.pop %v1867
        %v1869 = vmul.f32 %v1841, 1.442695
        %v1870 = vpow.pop %v1869
        %v1871 = vmul.f32 %v1842, 1.442695
        %v1872 = vpow.pop %v1871
        %v1873 = vmul.f32 %v1843, 1.442695
        %v1874 = vpow.pop %v1873
        %v1875 = vmul.f32 %v1844, 1.442695
        %v1876 = vpow.pop %v1875
        %v1877 = vadd.f32 %v1846, %v1848
        %v1878 = vadd.f32 %v1877, %v1850
        %v1879 = vadd.f32 %v1878, %v1852
        %v1880 = vadd.f32 %v1879, %v1854
        %v1881 = vadd.f32 %v1880, %v1856
        %v1882 = vadd.f32 %v1881, %v1858
        %v1883 = vadd.f32 %v1882, %v1860
        %v1884 = vadd.f32 %v1883, %v1862
        %v1885 = vadd.f32 %v1884, %v1864
        %v1886 = vadd.f32 %v1885, %v1866
        %v1887 = vadd.f32 %v1886, %v1868
        %v1888 = vadd.f32 %v1887, %v1870
        %v1889 = vadd.f32 %v1888, %v1872
        %v1890 = vadd.f32 %v1889, %v1874
        %v1891 = vadd.f32 %v1890, %v1876
        %v1892 = vrot.slane %v1891, 4
        %v1893 = vadd.f32 %v1891, %v1892
        %v1894 = vrot.slane %v1893, 2
        %v1895 = vadd.f32 %v1893, %v1894
        %v1896 = vrot.slane %v1895, 1
        %v1897 = vadd.f32 %v1895, %v1896
        %v1898 = vrcp.pop %v1897
        %v1899 = vpack.c.bf16 %v475, %v470
        %v1900 = vpack.c.bf16 %v1848, %v1846
        %v1901 = vpack.c.bf16 %v1852, %v1850
        %v1902 = vpack.c.bf16 %v1856, %v1854
        %v1903 = vpack.c.bf16 %v1860, %v1858
        %v1904 = vpack.c.bf16 %v1864, %v1862
        %v1905 = vpack.c.bf16 %v1868, %v1866
        %v1906 = vpack.c.bf16 %v1872, %v1870
        %v1907 = vpack.c.bf16 %v1876, %v1874
        %1908 = vmatprep.subr.bf16.mxu0 0
        %1909 = vmatpush1.bf16.msra.mxu0 %v1900
        %1910 = vmatprep.subr.bf16.mxu0 0
        %1911 = vmatpush1.bf16.msra.mxu0 %v1901
        %1912 = vmatprep.subr.bf16.mxu0 0
        %1913 = vmatpush1.bf16.msra.mxu0 %v1902
        %1914 = vmatprep.subr.bf16.mxu0 0
        %1915 = vmatpush1.bf16.msra.mxu0 %v1903
        %1916 = vmatprep.subr.bf16.mxu0 0
        %1917 = vmatpush1.bf16.msra.mxu0 %v1904
        %1918 = vmatprep.subr.bf16.mxu0 0
        %1919 = vmatpush1.bf16.msra.mxu0 %v1905
        %1920 = vmatprep.subr.bf16.mxu0 0
        %1921 = vmatpush1.bf16.msra.mxu0 %v1906
        %1922 = vmatprep.subr.bf16.mxu0 0
        %1923 = vmatpush1.bf16.msra.mxu0 %v1907
        %1924 = vmatprep.subr.bf16.mxu0 0
        %1925 = vmatpush1.bf16.msra.mxu0 0
        %1926 = vmatprep.subr.bf16.mxu0 0
        %1927 = vmatpush1.bf16.msra.mxu0 0
        %1928 = vmatprep.subr.bf16.mxu0 0
        %1929 = vmatpush1.bf16.msra.mxu0 0
        %1930 = vmatprep.subr.bf16.mxu0 0
        %1931 = vmatpush1.bf16.msra.mxu0 0
        %1932 = vmatprep.subr.bf16.mxu0 0
        %1933 = vmatpush1.bf16.msra.mxu0 0
        %1934 = vmatprep.subr.bf16.mxu0 0
        %1935 = vmatpush1.bf16.msra.mxu0 0
        %1936 = vmatprep.subr.bf16.mxu0 0
        %1937 = vmatpush1.bf16.msra.mxu0 0
        %1938 = vmatprep.subr.bf16.mxu0 0
        %1939 = vmatpush1.bf16.msra.mxu0 0
        %1940 = vmatprep.mubr.bf16.mxu0 0
        %1941 = vmatmul.mubr.bf16.gmra.mrb[0].mxu0 %v1899
        %v1942 = vpop.f32.mrb[0].mxu0
        %v1943 = vadd.f32 0.0, %v1942
        %v1944 = vpop.f32.mrb[0].mxu0
        %v1945 = vpop.f32.mrb[0].mxu0
        %v1946 = vadd.f32 0.0, %v1945
        %v1947 = vpop.f32.mrb[0].mxu0
        %1948 = vdwg.mxu0
        %v1949 = vmul.f32 %v1943, %v1898
        %v1950 = vmul.f32 %v1946, %v1898
        %1951 = vst [vmem:[%s163] sm:$0xff] %v845
        %1952 = vst [vmem:[%s163 + $0x8] sm:$0xff] %v846
        %1953 = vst [vmem:[%s163 + $0x10] sm:$0xff] %v1213
        %1954 = vst [vmem:[%s163 + $0x18] sm:$0xff] %v1214
        %1955 = vst [vmem:[%s163 + $0x20] sm:$0xff] %v1581
        %1956 = vst [vmem:[%s163 + $0x28] sm:$0xff] %v1582
        %1957 = vst [vmem:[%s163 + $0x30] sm:$0xff] %v1949
        %1958 = vst [vmem:[%s163 + $0x38] sm:$0xff] %v1950
        %s1959 = sand.u32 %s93, 1
        %s1960 = scalar_lea.sflag [#allocation3], %s1959
        %s1961 = sand.u32 %s93, 1
        %s1962 = smul.addr %s1961, 64
        %s1963 = scalar_lea.vmem [#allocation2], %s1962
        // Predicated region
        $region33: #{multihead_attn.1} parent=31 // pred_check
          %p1964 = pneg %p103
        $region34: #{multihead_attn.1} parent=31 // pred_check_branch
          %1966 = sbr.rel (%p1964) target = $region36
        $region35: #{multihead_attn.1} parent=31 // pred_region
          %s1968 = ssub.s32 1024, 1024
          %1969 = vsyncadd %s1960, %s1968
          %s1970 = smul.addr %s17, 8
          %s1971 = smul.addr %s1970, 128
          %s1972 = scalar_lea.hbm %s3, %s1971
          %s1973 = sshll.u32 %s1963, 4
          %s1974 = int_to_ptr.vmem [resolvable:$true] %s1973
          %1979 = dma.vmem_to_hbm [thread:$0]  %s1974, 1024, %s1972, %s1960, 128, 128, 8
        $region36: #{multihead_attn.1} parent=31 // pred_fallthru
          _
      $region32: #{multihead_attn.1} parent=5 // pred_fallthru
        _
      %p1980 = scmp.le.s32.totalorder 2, %s12
      // Predicated region
      $region37: #{multihead_attn.1} parent=5 // pred_check
        %p1981 = pneg %p1980
      $region38: #{multihead_attn.1} parent=5 // pred_check_branch
        %1983 = sbr.rel (%p1981) target = $region40
      $region39: #{multihead_attn.1} parent=5 // pred_region
        %s1984 = ssub.s32 %s12, 2
        // Predicated region
        $region41: #{multihead_attn.1} parent=39 // pred_check
          %p1985 = pneg %p109
        $region42: #{multihead_attn.1} parent=39 // pred_check_branch
          %1987 = sbr.rel (%p1985) target = $region44
        $region43: #{multihead_attn.1} parent=39 // pred_region
          %s1988 = sand.u32 %s94, 1
          %s1989 = scalar_lea.sflag [#allocation3], %s1988
          %s1990 = sand.u32 %s94, 1
          %s1991 = smul.addr %s1990, 64
          %s1992 = scalar_lea.vmem [#allocation2], %s1991
          %1993 = dma.done %s1989, 1024
        $region44: #{multihead_attn.1} parent=39 // pred_fallthru
          _
      $region40: #{multihead_attn.1} parent=5 // pred_fallthru
        _
    $region6: #{multihead_attn.1} parent=1 // loop_footer
      %s16 = sadd.s32 1, %s12
    $region7: #{multihead_attn.1} parent=1 // loop_footer_branch
      %11 = sbr.rel target = $region3
    $region8: #{multihead_attn.1} parent=1 // loop_exit
      _
    %1994 = vsyncpa [#allocation3], 1
    %s1995 = scalar_lea.sflag [#allocation3], 1
    %1996 = vsyncpa %s1995, 1

</llo_original>
